<compile_context>
chip_gen: v6e
topology: v6e:2x2x1
jax: 0.10.0
libtpu: 0.0.40
codegen_flags: <defaults>
</compile_context>

<pallas_src>
import jax
import jax.numpy as jnp
from jax.experimental import pallas as pl
from jax.experimental.pallas import tpu as pltpu


# ---------------- kernel 1: stem conv (single K=27 MXU matmul) + swish ----------------

def _stem_kernel_factory(Ho, Wo, Kc, Cout):
    HW = Ho * Wo

    def kernel(x_ref, w_ref, b_ref, o_ref):
        patches = x_ref[0].reshape(HW, Kc)                  # (HW, 27) bf16 im2col
        acc = jnp.dot(patches, w_ref[...],
                      preferred_element_type=jnp.float32) + b_ref[...]   # f32 acc
        acc = acc * jax.nn.sigmoid(acc)                     # swish in f32
        y = acc.reshape(Ho, Wo, Cout).astype(o_ref.dtype)
        # Write into the pre-padded output: zero the 1-px halo, then the interior.
        # The consumer (dwconv) then never needs a JAX-level jnp.pad round trip.
        o_ref[0] = jnp.zeros((Ho + 2, Wo + 2, Cout), o_ref.dtype)
        o_ref[0, 1:Ho + 1, 1:Wo + 1, :] = y

    return kernel


def stem_conv_swish_padded(patches, w27, b, Ho, Wo):
    """patches: (N, Ho, Wo, 27) bf16 im2col of the stride-2 3x3 stem.
    Returns (N, Ho+2, Wo+2, Cout) bf16 with a zeroed 1-px spatial halo."""
    N = patches.shape[0]
    Kc, Cout = w27.shape
    return pl.pallas_call(
        _stem_kernel_factory(Ho, Wo, Kc, Cout),
        out_shape=jax.ShapeDtypeStruct((N, Ho + 2, Wo + 2, Cout), jnp.bfloat16),
        grid=(N,),
        in_specs=[
            pl.BlockSpec((1, Ho, Wo, Kc), lambda n: (n, 0, 0, 0)),
            pl.BlockSpec((Kc, Cout), lambda n: (0, 0)),
            pl.BlockSpec((1, Cout), lambda n: (0, 0)),
        ],
        out_specs=pl.BlockSpec((1, Ho + 2, Wo + 2, Cout), lambda n: (n, 0, 0, 0)),
        compiler_params=pltpu.CompilerParams(
            dimension_semantics=("parallel",),
            vmem_limit_bytes=32 * 1024 * 1024),
    )(patches, w27, b.reshape(1, Cout))


# ------- kernel 2: fused MBConv (dw3x3 + swish + SE) + folded proj∘head + GAP --------

def _mbconv_head_kernel_factory(Ho, Wo, C, Ch):
    HW = Ho * Wo
    inv_hw = 1.0 / float(HW)

    def kernel(x_ref, dww_ref, dwb_ref, w1t_ref, b1_ref, w2_ref, b2_ref,
               wf_ref, bf_ref, o_ref):
        x = x_ref[0].astype(jnp.float32)                    # (Ho+2, Wo+2, C), halo=0
        dww = dww_ref[...]                                  # (3, 3, C) f32

        # depthwise 3x3 (stride 1, halo pre-zeroed by producer): 9 VPU taps.
        acc = jnp.zeros((Ho, Wo, C), jnp.float32)
        for di in range(3):
            for dj in range(3):
                acc = acc + x[di:di + Ho, dj:dj + Wo, :] * dww[di, dj]
        acc = acc + dwb_ref[...]                            # bias added once (hoisted)
        y = acc * jax.nn.sigmoid(acc)                       # swish, f32
        yf = y.reshape(HW, C)                               # (HW, C)

        # squeeze-excite entirely on VPU/XLU in f32 (no sub-tile f32 MXU matmuls):
        gap = jnp.sum(yf, axis=0, keepdims=True) * inv_hw                      # (1, C)
        s1 = jnp.sum(gap * w1t_ref[...], axis=1, keepdims=True) + b1_ref[...]  # (Cse,1)
        s1 = s1 * jax.nn.sigmoid(s1)                        # swish
        s2 = jnp.sum(s1 * w2_ref[...], axis=0, keepdims=True) + b2_ref[...]    # (1, C)
        yg = yf * jax.nn.sigmoid(s2)                        # SE gating

        # folded (1x1 projection ∘ 1x1 head) matmul: bf16 operands, f32 accumulate,
        # then head swish + global-average-pool -> lane-dense (1, 128) output.
        z = jnp.dot(yg.astype(jnp.bfloat16), wf_ref[...],
                    preferred_element_type=jnp.float32) + bf_ref[...]          # (HW, Ch)
        z = z * jax.nn.sigmoid(z)                           # head swish, f32
        o_ref[0] = jnp.sum(z, axis=0, keepdims=True) * inv_hw                  # GAP

    return kernel


def mbconv_head_gap(yp, p):
    """yp: (N, Ho+2, Wo+2, C) bf16, spatial halo already zero.  Returns (N, 1, Ch)."""
    N, Hp, Wp, C = yp.shape
    Ho, Wo = Hp - 2, Wp - 2
    Cse = p["se1_w"].shape[1]
    # Exact fold of proj into head (no nonlinearity/residual in between):
    #   (yg @ Wp + bp) @ Wh + bh == yg @ (Wp @ Wh) + (bp @ Wh + bh)
    fold_w = (p["proj_w"] @ p["head_w"]).astype(jnp.bfloat16)   # (C, Ch)
    fold_b = p["proj_b"] @ p["head_w"] + p["head_b"]            # (Ch,)
    Ch = fold_w.shape[1]
    return pl.pallas_call(
        _mbconv_head_kernel_factory(Ho, Wo, C, Ch),
        out_shape=jax.ShapeDtypeStruct((N, 1, Ch), jnp.float32),
        grid=(N,),
        in_specs=[
            pl.BlockSpec((1, Hp, Wp, C), lambda n: (n, 0, 0, 0)),
            pl.BlockSpec((3, 3, C), lambda n: (0, 0, 0)),
            pl.BlockSpec((1, C), lambda n: (0, 0)),
            pl.BlockSpec((Cse, C), lambda n: (0, 0)),      # SE reduce weight (transposed)
            pl.BlockSpec((Cse, 1), lambda n: (0, 0)),
            pl.BlockSpec((Cse, C), lambda n: (0, 0)),      # SE expand weight
            pl.BlockSpec((1, C), lambda n: (0, 0)),
            pl.BlockSpec((C, Ch), lambda n: (0, 0)),       # folded proj∘head weight
            pl.BlockSpec((1, Ch), lambda n: (0, 0)),
        ],
        out_specs=pl.BlockSpec((1, 1, Ch), lambda n: (n, 0, 0)),
        compiler_params=pltpu.CompilerParams(
            dimension_semantics=("parallel",),
            vmem_limit_bytes=32 * 1024 * 1024),
    )(yp,
      p["dw_w"], p["dw_b"].reshape(1, C),
      p["se1_w"].T, p["se1_b"].reshape(Cse, 1),
      p["se2_w"], p["se2_b"].reshape(1, C),
      fold_w, fold_b.reshape(1, Ch))


# ----------------------------------- params & forward --------------------------------

def init_params(key):
    # Deterministic synthetic weights (BatchNorms assumed folded into conv + bias).
    def dense(k, fan_in, shape):
        return jax.random.normal(k, shape, jnp.float32) / jnp.sqrt(float(fan_in))

    ks = jax.random.split(key, 12)
    p = {}
    p["stem_w"] = dense(ks[0], 27, (3, 3, 3, 32))   # (kh, kw, cin, cout)
    p["stem_b"] = 0.01 * jax.random.normal(ks[1], (32,), jnp.float32)
    p["dw_w"]   = dense(ks[2], 9, (3, 3, 32))       # depthwise 3x3 on 32 channels
    p["dw_b"]   = 0.01 * jax.random.normal(ks[3], (32,), jnp.float32)
    p["se1_w"]  = dense(ks[4], 32, (32, 8))         # SE squeeze (ratio 0.25)
    p["se1_b"]  = 0.01 * jax.random.normal(ks[5], (8,), jnp.float32)
    p["se2_w"]  = dense(ks[6], 8, (8, 32))          # SE excite
    p["se2_b"]  = 0.01 * jax.random.normal(ks[7], (32,), jnp.float32)
    p["proj_w"] = dense(ks[8], 32, (32, 16))        # MBConv 1x1 projection
    p["proj_b"] = 0.01 * jax.random.normal(ks[9], (16,), jnp.float32)
    p["head_w"] = dense(ks[10], 16, (16, 128))      # head 1x1 conv (1280 scaled to 128)
    p["head_b"] = 0.01 * jax.random.normal(ks[11], (128,), jnp.float32)
    return p


def effnet_forward(x_nchw, p):
    """Matches EffNet.forward: feat = extract_features(x); adaptive_avg_pool2d(1); view(bs,-1)."""
    bs = x_nchw.shape[0]
    x = jnp.transpose(x_nchw, (0, 2, 3, 1))             # NCHW -> NHWC
    N, H, W, Cin = x.shape
    Ho, Wo = H // 2, W // 2

    # Stem stride-2 3x3 im2col at JAX level: with Cin=3 it is only 27 channels at the
    # (Ho, Wo) map (tiny), stored bf16 to halve the HBM hop; kernel 1 is then a single
    # lane-friendly (HW,27)@(27,32) MXU matmul with zero in-kernel slicing.
    xp = jnp.pad(x, ((0, 0), (1, 1), (1, 1), (0, 0)))
    taps = [xp[:, di:di + 2 * Ho:2, dj:dj + 2 * Wo:2, :]
            for di in range(3) for dj in range(3)]
    patches = jnp.concatenate(taps, axis=-1).astype(jnp.bfloat16)   # (N, Ho, Wo, 27)
    w27 = p["stem_w"].reshape(9 * Cin, -1).astype(jnp.bfloat16)     # (27, 32)

    # kernel 1: stem conv + swish, pre-padded bf16 output (halo zeroed in-kernel)
    yp = stem_conv_swish_padded(patches, w27, p["stem_b"], Ho, Wo)  # (N, Ho+2, Wo+2, 32)

    # kernel 2: MBConv (dw3x3 + swish + SE) + folded proj∘head + swish + GAP
    feat = mbconv_head_gap(yp, p)                                   # (N, 1, 128)
    return feat.reshape(bs, -1)


if __name__ == "__main__":
    key = jax.random.PRNGKey(0)
    kx, kp = jax.random.split(key)
    x = jax.random.normal(kx, (2, 3, 16, 16), jnp.float32)   # NCHW, like PyTorch
    params = init_params(kp)

    feat = jax.jit(effnet_forward)(x, params)
    feat = jax.block_until_ready(feat)

    assert feat.shape == (2, 128), feat.shape
    assert feat.dtype == jnp.float32
    assert bool(jnp.all(jnp.isfinite(feat)))
    print("KERNEL_OK")
</pallas_src>

<mosaic_0001>
module attributes {stable_mosaic.version = 11 : i64} {
  func.func @kernel(%arg0: i32, %arg1: memref<1x8x8x27xbf16, #tpu.memory_space<vmem>>, %arg2: memref<27x32xbf16, #tpu.memory_space<vmem>>, %arg3: memref<1x32xf32, #tpu.memory_space<vmem>>, %arg4: memref<1x10x10x32xbf16, #tpu.memory_space<vmem>>) attributes {dimension_semantics = [#tpu.dimension_semantics<parallel>], iteration_bounds = array<i64: 2>, scalar_prefetch = 0 : i64, scratch_operands = 0 : i64, tpu.core_type = #tpu.core_type<tc>, window_params = [{transform_indices = @transform_0, window_bounds = array<i64: 1, 8, 8, 27>}, {pipeline_mode = #tpu.pipeline_mode<synchronous>, transform_indices = @transform_1, window_bounds = array<i64: 27, 32>}, {pipeline_mode = #tpu.pipeline_mode<synchronous>, transform_indices = @transform_2, window_bounds = array<i64: 1, 32>}, {transform_indices = @transform_3, window_bounds = array<i64: 1, 10, 10, 32>}]} {
    %c0 = arith.constant 0 : index
    %c0_0 = arith.constant 0 : index
    %c0_1 = arith.constant 0 : index
    %c0_2 = arith.constant 0 : index
    %0 = vector.load %arg1[%c0, %c0_0, %c0_1, %c0_2] : memref<1x8x8x27xbf16, #tpu.memory_space<vmem>>, vector<1x8x8x27xbf16>
    %1 = vector.shape_cast %0 : vector<1x8x8x27xbf16> to vector<8x8x27xbf16>
    %2 = vector.shape_cast %1 : vector<8x8x27xbf16> to vector<64x27xbf16>
    %c0_3 = arith.constant 0 : index
    %c0_4 = arith.constant 0 : index
    %3 = vector.load %arg2[%c0_3, %c0_4] : memref<27x32xbf16, #tpu.memory_space<vmem>>, vector<27x32xbf16>
    %cst = arith.constant dense<0.000000e+00> : vector<64x32xf32>
    %4 = tpu.matmul %2, %3, %cst {dimension_numbers = #tpu.dot_dimension_numbers<[1], [0], [0], [1], [0, 0, 1, 1], [], []>} : vector<64x27xbf16>, vector<27x32xbf16>, vector<64x32xf32> -> vector<64x32xf32>
    %c0_5 = arith.constant 0 : index
    %c0_6 = arith.constant 0 : index
    %5 = vector.load %arg3[%c0_5, %c0_6] : memref<1x32xf32, #tpu.memory_space<vmem>>, vector<1x32xf32>
    %6 = vector.broadcast %5 : vector<1x32xf32> to vector<64x32xf32>
    %7 = arith.addf %4, %6 : vector<64x32xf32>
    %8 = arith.negf %7 : vector<64x32xf32>
    %9 = math.exp %8 : vector<64x32xf32>
    %cst_7 = arith.constant 1.000000e+00 : f32
    %10 = vector.broadcast %cst_7 : f32 to vector<64x32xf32>
    %11 = arith.addf %10, %9 : vector<64x32xf32>
    %12 = arith.divf %10, %11 : vector<64x32xf32>
    %13 = arith.mulf %7, %12 : vector<64x32xf32>
    %14 = vector.shape_cast %13 : vector<64x32xf32> to vector<8x8x32xf32>
    %15 = arith.truncf %14 : vector<8x8x32xf32> to vector<8x8x32xbf16>
    %cst_8 = arith.constant 0.000000e+00 : bf16
    %16 = vector.broadcast %cst_8 : bf16 to vector<10x10x32xbf16>
    %c0_9 = arith.constant 0 : index
    %c0_10 = arith.constant 0 : index
    %c0_11 = arith.constant 0 : index
    %c0_12 = arith.constant 0 : index
    %17 = vector.load %arg4[%c0_9, %c0_10, %c0_11, %c0_12] : memref<1x10x10x32xbf16, #tpu.memory_space<vmem>>, vector<1x10x10x32xbf16>
    %18 = vector.shape_cast %17 : vector<1x10x10x32xbf16> to vector<10x10x32xbf16>
    %19 = vector.shape_cast %16 : vector<10x10x32xbf16> to vector<1x10x10x32xbf16>
    tpu.vector_store %arg4[%c0_9, %c0_10, %c0_11, %c0_12], %19 {strides = array<i32>} : memref<1x10x10x32xbf16, #tpu.memory_space<vmem>>, vector<1x10x10x32xbf16>,
    %c0_13 = arith.constant 0 : index
    %c1 = arith.constant 1 : index
    %c1_14 = arith.constant 1 : index
    %c0_15 = arith.constant 0 : index
    %20 = vector.load %arg4[%c0_13, %c1, %c1_14, %c0_15] : memref<1x10x10x32xbf16, #tpu.memory_space<vmem>>, vector<1x8x8x32xbf16>
    %21 = vector.shape_cast %20 : vector<1x8x8x32xbf16> to vector<8x8x32xbf16>
    %22 = vector.shape_cast %15 : vector<8x8x32xbf16> to vector<1x8x8x32xbf16>
    tpu.vector_store %arg4[%c0_13, %c1, %c1_14, %c0_15], %22 {strides = array<i32>} : memref<1x10x10x32xbf16, #tpu.memory_space<vmem>>, vector<1x8x8x32xbf16>,
    return
  }
  func.func @transform_0(%arg0: i32) -> (i32, i32, i32, i32) {
    %c0_i32 = arith.constant 0 : i32
    %c0_i32_0 = arith.constant 0 : i32
    %c0_i32_1 = arith.constant 0 : i32
    %c0_i32_2 = arith.constant 0 : i32
    return %arg0, %c0_i32, %c0_i32_0, %c0_i32_1 : i32, i32, i32, i32
  }
  func.func @transform_1(%arg0: i32) -> (i32, i32) {
    %c0_i32 = arith.constant 0 : i32
    %c0_i32_0 = arith.constant 0 : i32
    %c0_i32_1 = arith.constant 0 : i32
    return %c0_i32, %c0_i32_0 : i32, i32
  }
  func.func @transform_2(%arg0: i32) -> (i32, i32) {
    %c0_i32 = arith.constant 0 : i32
    %c0_i32_0 = arith.constant 0 : i32
    %c0_i32_1 = arith.constant 0 : i32
    return %c0_i32, %c0_i32_0 : i32, i32
  }
  func.func @transform_3(%arg0: i32) -> (i32, i32, i32, i32) {
    %c0_i32 = arith.constant 0 : i32
    %c0_i32_0 = arith.constant 0 : i32
    %c0_i32_1 = arith.constant 0 : i32
    %c0_i32_2 = arith.constant 0 : i32
    return %arg0, %c0_i32, %c0_i32_0, %c0_i32_1 : i32, i32, i32, i32
  }
}

module attributes {stable_mosaic.version = 11 : i64} {
  func.func @kernel(%arg0: i32, %arg1: memref<1x10x10x32xbf16, #tpu.memory_space<vmem>>, %arg2: memref<3x3x32xf32, #tpu.memory_space<vmem>>, %arg3: memref<1x32xf32, #tpu.memory_space<vmem>>, %arg4: memref<8x32xf32, #tpu.memory_space<vmem>>, %arg5: memref<8x1xf32, #tpu.memory_space<vmem>>, %arg6: memref<8x32xf32, #tpu.memory_space<vmem>>, %arg7: memref<1x32xf32, #tpu.memory_space<vmem>>, %arg8: memref<32x128xbf16, #tpu.memory_space<vmem>>, %arg9: memref<1x128xf32, #tpu.memory_space<vmem>>, %arg10: memref<1x1x128xf32, #tpu.memory_space<vmem>>) attributes {dimension_semantics = [#tpu.dimension_semantics<parallel>], iteration_bounds = array<i64: 2>, scalar_prefetch = 0 : i64, scratch_operands = 0 : i64, tpu.core_type = #tpu.core_type<tc>, window_params = [{transform_indices = @transform_0, window_bounds = array<i64: 1, 10, 10, 32>}, {pipeline_mode = #tpu.pipeline_mode<synchronous>, transform_indices = @transform_1, window_bounds = array<i64: 3, 3, 32>}, {pipeline_mode = #tpu.pipeline_mode<synchronous>, transform_indices = @transform_2, window_bounds = array<i64: 1, 32>}, {pipeline_mode = #tpu.pipeline_mode<synchronous>, transform_indices = @transform_3, window_bounds = array<i64: 8, 32>}, {pipeline_mode = #tpu.pipeline_mode<synchronous>, transform_indices = @transform_4, window_bounds = array<i64: 8, 1>}, {pipeline_mode = #tpu.pipeline_mode<synchronous>, transform_indices = @transform_5, window_bounds = array<i64: 8, 32>}, {pipeline_mode = #tpu.pipeline_mode<synchronous>, transform_indices = @transform_6, window_bounds = array<i64: 1, 32>}, {pipeline_mode = #tpu.pipeline_mode<synchronous>, transform_indices = @transform_7, window_bounds = array<i64: 32, 128>}, {pipeline_mode = #tpu.pipeline_mode<synchronous>, transform_indices = @transform_8, window_bounds = array<i64: 1, 128>}, {transform_indices = @transform_9, window_bounds = array<i64: 1, 1, 128>}]} {
    %c0 = arith.constant 0 : index
    %c0_0 = arith.constant 0 : index
    %c0_1 = arith.constant 0 : index
    %c0_2 = arith.constant 0 : index
    %0 = vector.load %arg1[%c0, %c0_0, %c0_1, %c0_2] : memref<1x10x10x32xbf16, #tpu.memory_space<vmem>>, vector<1x10x10x32xbf16>
    %1 = vector.shape_cast %0 : vector<1x10x10x32xbf16> to vector<10x10x32xbf16>
    %2 = arith.extf %1 : vector<10x10x32xbf16> to vector<10x10x32xf32>
    %c0_3 = arith.constant 0 : index
    %c0_4 = arith.constant 0 : index
    %c0_5 = arith.constant 0 : index
    %3 = vector.load %arg2[%c0_3, %c0_4, %c0_5] : memref<3x3x32xf32, #tpu.memory_space<vmem>>, vector<3x3x32xf32>
    %cst = arith.constant 0.000000e+00 : f32
    %4 = vector.broadcast %cst : f32 to vector<8x8x32xf32>
    %5 = vector.extract_strided_slice %2 {offsets = [0, 0, 0], sizes = [8, 8, 32], strides = [1, 1, 1]} : vector<10x10x32xf32> to vector<8x8x32xf32>
    %6 = vector.extract_strided_slice %3 {offsets = [0, 0, 0], sizes = [1, 1, 32], strides = [1, 1, 1]} : vector<3x3x32xf32> to vector<1x1x32xf32>
    %7 = vector.shape_cast %6 : vector<1x1x32xf32> to vector<32xf32>
    %8 = vector.shape_cast %7 : vector<32xf32> to vector<1x1x32xf32>
    %9 = vector.broadcast %8 : vector<1x1x32xf32> to vector<8x8x32xf32>
    %10 = arith.mulf %5, %9 : vector<8x8x32xf32>
    %11 = arith.addf %4, %10 : vector<8x8x32xf32>
    %12 = vector.extract_strided_slice %2 {offsets = [0, 1, 0], sizes = [8, 8, 32], strides = [1, 1, 1]} : vector<10x10x32xf32> to vector<8x8x32xf32>
    %13 = vector.extract_strided_slice %3 {offsets = [0, 1, 0], sizes = [1, 1, 32], strides = [1, 1, 1]} : vector<3x3x32xf32> to vector<1x1x32xf32>
    %14 = vector.shape_cast %13 : vector<1x1x32xf32> to vector<32xf32>
    %15 = vector.shape_cast %14 : vector<32xf32> to vector<1x1x32xf32>
    %16 = vector.broadcast %15 : vector<1x1x32xf32> to vector<8x8x32xf32>
    %17 = arith.mulf %12, %16 : vector<8x8x32xf32>
    %18 = arith.addf %11, %17 : vector<8x8x32xf32>
    %19 = vector.extract_strided_slice %2 {offsets = [0, 2, 0], sizes = [8, 8, 32], strides = [1, 1, 1]} : vector<10x10x32xf32> to vector<8x8x32xf32>
    %20 = vector.extract_strided_slice %3 {offsets = [0, 2, 0], sizes = [1, 1, 32], strides = [1, 1, 1]} : vector<3x3x32xf32> to vector<1x1x32xf32>
    %21 = vector.shape_cast %20 : vector<1x1x32xf32> to vector<32xf32>
    %22 = vector.shape_cast %21 : vector<32xf32> to vector<1x1x32xf32>
    %23 = vector.broadcast %22 : vector<1x1x32xf32> to vector<8x8x32xf32>
    %24 = arith.mulf %19, %23 : vector<8x8x32xf32>
    %25 = arith.addf %18, %24 : vector<8x8x32xf32>
    %26 = vector.extract_strided_slice %2 {offsets = [1, 0, 0], sizes = [8, 8, 32], strides = [1, 1, 1]} : vector<10x10x32xf32> to vector<8x8x32xf32>
    %27 = vector.extract_strided_slice %3 {offsets = [1, 0, 0], sizes = [1, 1, 32], strides = [1, 1, 1]} : vector<3x3x32xf32> to vector<1x1x32xf32>
    %28 = vector.shape_cast %27 : vector<1x1x32xf32> to vector<32xf32>
    %29 = vector.shape_cast %28 : vector<32xf32> to vector<1x1x32xf32>
    %30 = vector.broadcast %29 : vector<1x1x32xf32> to vector<8x8x32xf32>
    %31 = arith.mulf %26, %30 : vector<8x8x32xf32>
    %32 = arith.addf %25, %31 : vector<8x8x32xf32>
    %33 = vector.extract_strided_slice %2 {offsets = [1, 1, 0], sizes = [8, 8, 32], strides = [1, 1, 1]} : vector<10x10x32xf32> to vector<8x8x32xf32>
    %34 = vector.extract_strided_slice %3 {offsets = [1, 1, 0], sizes = [1, 1, 32], strides = [1, 1, 1]} : vector<3x3x32xf32> to vector<1x1x32xf32>
    %35 = vector.shape_cast %34 : vector<1x1x32xf32> to vector<32xf32>
    %36 = vector.shape_cast %35 : vector<32xf32> to vector<1x1x32xf32>
    %37 = vector.broadcast %36 : vector<1x1x32xf32> to vector<8x8x32xf32>
    %38 = arith.mulf %33, %37 : vector<8x8x32xf32>
    %39 = arith.addf %32, %38 : vector<8x8x32xf32>
    %40 = vector.extract_strided_slice %2 {offsets = [1, 2, 0], sizes = [8, 8, 32], strides = [1, 1, 1]} : vector<10x10x32xf32> to vector<8x8x32xf32>
    %41 = vector.extract_strided_slice %3 {offsets = [1, 2, 0], sizes = [1, 1, 32], strides = [1, 1, 1]} : vector<3x3x32xf32> to vector<1x1x32xf32>
    %42 = vector.shape_cast %41 : vector<1x1x32xf32> to vector<32xf32>
    %43 = vector.shape_cast %42 : vector<32xf32> to vector<1x1x32xf32>
    %44 = vector.broadcast %43 : vector<1x1x32xf32> to vector<8x8x32xf32>
    %45 = arith.mulf %40, %44 : vector<8x8x32xf32>
    %46 = arith.addf %39, %45 : vector<8x8x32xf32>
    %47 = vector.extract_strided_slice %2 {offsets = [2, 0, 0], sizes = [8, 8, 32], strides = [1, 1, 1]} : vector<10x10x32xf32> to vector<8x8x32xf32>
    %48 = vector.extract_strided_slice %3 {offsets = [2, 0, 0], sizes = [1, 1, 32], strides = [1, 1, 1]} : vector<3x3x32xf32> to vector<1x1x32xf32>
    %49 = vector.shape_cast %48 : vector<1x1x32xf32> to vector<32xf32>
    %50 = vector.shape_cast %49 : vector<32xf32> to vector<1x1x32xf32>
    %51 = vector.broadcast %50 : vector<1x1x32xf32> to vector<8x8x32xf32>
    %52 = arith.mulf %47, %51 : vector<8x8x32xf32>
    %53 = arith.addf %46, %52 : vector<8x8x32xf32>
    %54 = vector.extract_strided_slice %2 {offsets = [2, 1, 0], sizes = [8, 8, 32], strides = [1, 1, 1]} : vector<10x10x32xf32> to vector<8x8x32xf32>
    %55 = vector.extract_strided_slice %3 {offsets = [2, 1, 0], sizes = [1, 1, 32], strides = [1, 1, 1]} : vector<3x3x32xf32> to vector<1x1x32xf32>
    %56 = vector.shape_cast %55 : vector<1x1x32xf32> to vector<32xf32>
    %57 = vector.shape_cast %56 : vector<32xf32> to vector<1x1x32xf32>
    %58 = vector.broadcast %57 : vector<1x1x32xf32> to vector<8x8x32xf32>
    %59 = arith.mulf %54, %58 : vector<8x8x32xf32>
    %60 = arith.addf %53, %59 : vector<8x8x32xf32>
    %61 = vector.extract_strided_slice %2 {offsets = [2, 2, 0], sizes = [8, 8, 32], strides = [1, 1, 1]} : vector<10x10x32xf32> to vector<8x8x32xf32>
    %62 = vector.extract_strided_slice %3 {offsets = [2, 2, 0], sizes = [1, 1, 32], strides = [1, 1, 1]} : vector<3x3x32xf32> to vector<1x1x32xf32>
    %63 = vector.shape_cast %62 : vector<1x1x32xf32> to vector<32xf32>
    %64 = vector.shape_cast %63 : vector<32xf32> to vector<1x1x32xf32>
    %65 = vector.broadcast %64 : vector<1x1x32xf32> to vector<8x8x32xf32>
    %66 = arith.mulf %61, %65 : vector<8x8x32xf32>
    %67 = arith.addf %60, %66 : vector<8x8x32xf32>
    %c0_6 = arith.constant 0 : index
    %c0_7 = arith.constant 0 : index
    %68 = vector.load %arg3[%c0_6, %c0_7] : memref<1x32xf32, #tpu.memory_space<vmem>>, vector<1x32xf32>
    %69 = vector.shape_cast %68 : vector<1x32xf32> to vector<1x1x32xf32>
    %70 = vector.broadcast %69 : vector<1x1x32xf32> to vector<8x8x32xf32>
    %71 = arith.addf %67, %70 : vector<8x8x32xf32>
    %72 = arith.negf %71 : vector<8x8x32xf32>
    %73 = math.exp %72 : vector<8x8x32xf32>
    %cst_8 = arith.constant 1.000000e+00 : f32
    %74 = vector.broadcast %cst_8 : f32 to vector<8x8x32xf32>
    %75 = arith.addf %74, %73 : vector<8x8x32xf32>
    %76 = arith.divf %74, %75 : vector<8x8x32xf32>
    %77 = arith.mulf %71, %76 : vector<8x8x32xf32>
    %78 = vector.shape_cast %77 : vector<8x8x32xf32> to vector<64x32xf32>
    %cst_9 = arith.constant dense<0.000000e+00> : vector<32xf32>
    %79 = vector.multi_reduction <add>, %78, %cst_9 [0] : vector<64x32xf32> to vector<32xf32>
    %80 = vector.shape_cast %79 : vector<32xf32> to vector<1x32xf32>
    %cst_10 = arith.constant 1.562500e-02 : f32
    %81 = vector.broadcast %cst_10 : f32 to vector<1x32xf32>
    %82 = arith.mulf %80, %81 : vector<1x32xf32>
    %c0_11 = arith.constant 0 : index
    %c0_12 = arith.constant 0 : index
    %83 = vector.load %arg4[%c0_11, %c0_12] : memref<8x32xf32, #tpu.memory_space<vmem>>, vector<8x32xf32>
    %84 = vector.broadcast %82 : vector<1x32xf32> to vector<8x32xf32>
    %85 = arith.mulf %84, %83 : vector<8x32xf32>
    %cst_13 = arith.constant dense<0.000000e+00> : vector<8xf32>
    %86 = vector.multi_reduction <add>, %85, %cst_13 [1] : vector<8x32xf32> to vector<8xf32>
    %87 = vector.shape_cast %86 : vector<8xf32> to vector<8x1xf32>
    %c0_14 = arith.constant 0 : index
    %c0_15 = arith.constant 0 : index
    %88 = vector.load %arg5[%c0_14, %c0_15] : memref<8x1xf32, #tpu.memory_space<vmem>>, vector<8x1xf32>
    %89 = arith.addf %87, %88 : vector<8x1xf32>
    %90 = arith.negf %89 : vector<8x1xf32>
    %91 = math.exp %90 : vector<8x1xf32>
    %cst_16 = arith.constant 1.000000e+00 : f32
    %92 = vector.broadcast %cst_16 : f32 to vector<8x1xf32>
    %93 = arith.addf %92, %91 : vector<8x1xf32>
    %94 = arith.divf %92, %93 : vector<8x1xf32>
    %95 = arith.mulf %89, %94 : vector<8x1xf32>
    %c0_17 = arith.constant 0 : index
    %c0_18 = arith.constant 0 : index
    %96 = vector.load %arg6[%c0_17, %c0_18] : memref<8x32xf32, #tpu.memory_space<vmem>>, vector<8x32xf32>
    %97 = vector.broadcast %95 : vector<8x1xf32> to vector<8x32xf32>
    %98 = arith.mulf %97, %96 : vector<8x32xf32>
    %cst_19 = arith.constant dense<0.000000e+00> : vector<32xf32>
    %99 = vector.multi_reduction <add>, %98, %cst_19 [0] : vector<8x32xf32> to vector<32xf32>
    %100 = vector.shape_cast %99 : vector<32xf32> to vector<1x32xf32>
    %c0_20 = arith.constant 0 : index
    %c0_21 = arith.constant 0 : index
    %101 = vector.load %arg7[%c0_20, %c0_21] : memref<1x32xf32, #tpu.memory_space<vmem>>, vector<1x32xf32>
    %102 = arith.addf %100, %101 : vector<1x32xf32>
    %103 = arith.negf %102 : vector<1x32xf32>
    %104 = math.exp %103 : vector<1x32xf32>
    %cst_22 = arith.constant 1.000000e+00 : f32
    %105 = vector.broadcast %cst_22 : f32 to vector<1x32xf32>
    %106 = arith.addf %105, %104 : vector<1x32xf32>
    %107 = arith.divf %105, %106 : vector<1x32xf32>
    %108 = vector.broadcast %107 : vector<1x32xf32> to vector<64x32xf32>
    %109 = arith.mulf %78, %108 : vector<64x32xf32>
    %110 = arith.truncf %109 : vector<64x32xf32> to vector<64x32xbf16>
    %c0_23 = arith.constant 0 : index
    %c0_24 = arith.constant 0 : index
    %111 = vector.load %arg8[%c0_23, %c0_24] : memref<32x128xbf16, #tpu.memory_space<vmem>>, vector<32x128xbf16>
    %cst_25 = arith.constant dense<0.000000e+00> : vector<64x128xf32>
    %112 = tpu.matmul %110, %111, %cst_25 {dimension_numbers = #tpu.dot_dimension_numbers<[1], [0], [0], [1], [0, 0, 1, 1], [], []>} : vector<64x32xbf16>, vector<32x128xbf16>, vector<64x128xf32> -> vector<64x128xf32>
    %c0_26 = arith.constant 0 : index
    %c0_27 = arith.constant 0 : index
    %113 = vector.load %arg9[%c0_26, %c0_27] : memref<1x128xf32, #tpu.memory_space<vmem>>, vector<1x128xf32>
    %114 = vector.broadcast %113 : vector<1x128xf32> to vector<64x128xf32>
    %115 = arith.addf %112, %114 : vector<64x128xf32>
    %116 = arith.negf %115 : vector<64x128xf32>
    %117 = math.exp %116 : vector<64x128xf32>
    %cst_28 = arith.constant 1.000000e+00 : f32
    %118 = vector.broadcast %cst_28 : f32 to vector<64x128xf32>
    %119 = arith.addf %118, %117 : vector<64x128xf32>
    %120 = arith.divf %118, %119 : vector<64x128xf32>
    %121 = arith.mulf %115, %120 : vector<64x128xf32>
    %cst_29 = arith.constant dense<0.000000e+00> : vector<128xf32>
    %122 = vector.multi_reduction <add>, %121, %cst_29 [0] : vector<64x128xf32> to vector<128xf32>
    %123 = vector.shape_cast %122 : vector<128xf32> to vector<1x128xf32>
    %cst_30 = arith.constant 1.562500e-02 : f32
    %124 = vector.broadcast %cst_30 : f32 to vector<1x128xf32>
    %125 = arith.mulf %123, %124 : vector<1x128xf32>
    %c0_31 = arith.constant 0 : index
    %c0_32 = arith.constant 0 : index
    %c0_33 = arith.constant 0 : index
    %126 = vector.load %arg10[%c0_31, %c0_32, %c0_33] : memref<1x1x128xf32, #tpu.memory_space<vmem>>, vector<1x1x128xf32>
    %127 = vector.shape_cast %126 : vector<1x1x128xf32> to vector<1x128xf32>
    %128 = vector.shape_cast %125 : vector<1x128xf32> to vector<1x1x128xf32>
    tpu.vector_store %arg10[%c0_31, %c0_32, %c0_33], %128 {strides = array<i32>} : memref<1x1x128xf32, #tpu.memory_space<vmem>>, vector<1x1x128xf32>,
    return
  }
  func.func @transform_0(%arg0: i32) -> (i32, i32, i32, i32) {
    %c0_i32 = arith.constant 0 : i32
    %c0_i32_0 = arith.constant 0 : i32
    %c0_i32_1 = arith.constant 0 : i32
    %c0_i32_2 = arith.constant 0 : i32
    return %arg0, %c0_i32, %c0_i32_0, %c0_i32_1 : i32, i32, i32, i32
  }
  func.func @transform_1(%arg0: i32) -> (i32, i32, i32) {
    %c0_i32 = arith.constant 0 : i32
    %c0_i32_0 = arith.constant 0 : i32
    %c0_i32_1 = arith.constant 0 : i32
    %c0_i32_2 = arith.constant 0 : i32
    return %c0_i32, %c0_i32_0, %c0_i32_1 : i32, i32, i32
  }
  func.func @transform_2(%arg0: i32) -> (i32, i32) {
    %c0_i32 = arith.constant 0 : i32
    %c0_i32_0 = arith.constant 0 : i32
    %c0_i32_1 = arith.constant 0 : i32
    return %c0_i32, %c0_i32_0 : i32, i32
  }
  func.func @transform_3(%arg0: i32) -> (i32, i32) {
    %c0_i32 = arith.constant 0 : i32
    %c0_i32_0 = arith.constant 0 : i32
    %c0_i32_1 = arith.constant 0 : i32
    return %c0_i32, %c0_i32_0 : i32, i32
  }
  func.func @transform_4(%arg0: i32) -> (i32, i32) {
    %c0_i32 = arith.constant 0 : i32
    %c0_i32_0 = arith.constant 0 : i32
    %c0_i32_1 = arith.constant 0 : i32
    return %c0_i32, %c0_i32_0 : i32, i32
  }
  func.func @transform_5(%arg0: i32) -> (i32, i32) {
    %c0_i32 = arith.constant 0 : i32
    %c0_i32_0 = arith.constant 0 : i32
    %c0_i32_1 = arith.constant 0 : i32
    return %c0_i32, %c0_i32_0 : i32, i32
  }
  func.func @transform_6(%arg0: i32) -> (i32, i32) {
    %c0_i32 = arith.constant 0 : i32
    %c0_i32_0 = arith.constant 0 : i32
    %c0_i32_1 = arith.constant 0 : i32
    return %c0_i32, %c0_i32_0 : i32, i32
  }
  func.func @transform_7(%arg0: i32) -> (i32, i32) {
    %c0_i32 = arith.constant 0 : i32
    %c0_i32_0 = arith.constant 0 : i32
    %c0_i32_1 = arith.constant 0 : i32
    return %c0_i32, %c0_i32_0 : i32, i32
  }
  func.func @transform_8(%arg0: i32) -> (i32, i32) {
    %c0_i32 = arith.constant 0 : i32
    %c0_i32_0 = arith.constant 0 : i32
    %c0_i32_1 = arith.constant 0 : i32
    return %c0_i32, %c0_i32_0 : i32, i32
  }
  func.func @transform_9(%arg0: i32) -> (i32, i32, i32) {
    %c0_i32 = arith.constant 0 : i32
    %c0_i32_0 = arith.constant 0 : i32
    %c0_i32_1 = arith.constant 0 : i32
    return %arg0, %c0_i32, %c0_i32_0 : i32, i32, i32
  }
}

</mosaic_0001>

<llo_original>
// kernel: effnet_forward.2
$region0: #{effnet_forward.2}
  #allocation0 [shape = 'u32[]', space=smem, size = 0x4, offset = 0x4, fixed_abs, tag = 'smem constant byte address 0x4 - core index']
  #allocation1 [shape = 'u32[144,128]{1,0:T(1,128)}', space=vmem, size = 0x12000, scoped, tag = 'internal scratch']
  %s0 = inlined_call_operand.vmem [shape: bf16[2,8,8,27], index: 0, kind: input, shape index: {}]
  %s1 = inlined_call_operand.vmem [shape: bf16[27,32], index: 1, kind: input, shape index: {}]
  %s2 = inlined_call_operand.vmem [shape: f32[1,32], index: 2, kind: input, shape index: {}]
  %s3 = inlined_call_operand.vmem [shape: bf16[2,10,10,32], index: 3, kind: output, shape index: {}]
  %s4 = sld [smem:[#allocation0]]
  $region45: #{effnet_forward.2} parent=0
    _
  %s6 = ssub.s32 1, %s4
  %s7 = scalar_select 0, %s6, %s4
  loop: start=0, step=1, limit=4
  $region2: #{effnet_forward.2} parent=0 // loop_pre_header
    _
  $region3: #{effnet_forward.2} parent=0 // loop_header
    %s9 = sphi 0, %s13
    %p10 = scmp.ge.s32.totalorder %s9, 4
    %s19 = sphi 0, %s21
    %s22 = sphi 0, %s19
    %s23 = sphi 0, %s22
    %s39 = sphi 0, %s23
    %s43 = sphi 0, %s43
    %s45 = sphi 0, %s43
    %s46 = sphi 0, %s45
    %s60 = sphi 0, %s46
    %s64 = sphi 0, %s64
    %s66 = sphi 0, %s64
    %s67 = sphi 0, %s66
    %s81 = sphi 0, %s67
    %s87 = sphi 0, %s89
    %s90 = sphi 0, %s87
    %s91 = sphi 0, %s90
    %s107 = sphi 0, %s91
  $region4: #{effnet_forward.2} parent=0 // loop_header_branch
    %12 = sbr.rel (%p10) target = $region8
  $region5: #{effnet_forward.2} parent=0 // loop_body
    %s14 = ssub.s32 %s9, 1
    %s15 = ssub.s32 %s9, 2
    %s16 = sadd.s32 %s9, 1
    %s17 = ssub.s32 %s9, %s16
    %p18 = scmp.eq.s32.totalorder %s17, 0
    %s20 = sadd.s32 %s19, 1
    %s21 = scalar_select %p18, %s19, %s20
    %p24 = pneg %p18
    %p25 = scmp.eq.s32.totalorder %s9, 1
    %p26 = por %p24, %p25
    %p27 = scmp.ne.s32.totalorder %s19, %s22
    %p28 = scmp.eq.s32.totalorder %s9, 0
    %p29 = por %p27, %p28
    %p30 = scmp.ne.s32.totalorder %s19, %s22
    %p31 = scmp.eq.s32.totalorder %s14, 1
    %p32 = por %p30, %p31
    %p33 = scmp.ne.s32.totalorder %s22, %s23
    %p34 = scmp.eq.s32.totalorder %s14, 0
    %p35 = por %p33, %p34
    %p36 = scmp.ne.s32.totalorder %s22, %s23
    %p37 = scmp.eq.s32.totalorder %s15, 1
    %p38 = por %p36, %p37
    %p40 = scmp.ne.s32.totalorder %s23, %s39
    %p41 = scmp.eq.s32.totalorder %s15, 0
    %p42 = por %p40, %p41
    %s44 = sadd.s32 %s43, 1
    %p47 = scmp.eq.s32.totalorder %s9, 1
    %p48 = scmp.ne.s32.totalorder %s43, %s45
    %p49 = scmp.eq.s32.totalorder %s9, 0
    %p50 = por %p48, %p49
    %p51 = scmp.ne.s32.totalorder %s43, %s45
    %p52 = scmp.eq.s32.totalorder %s14, 1
    %p53 = por %p51, %p52
    %p54 = scmp.ne.s32.totalorder %s45, %s46
    %p55 = scmp.eq.s32.totalorder %s14, 0
    %p56 = por %p54, %p55
    %p57 = scmp.ne.s32.totalorder %s45, %s46
    %p58 = scmp.eq.s32.totalorder %s15, 1
    %p59 = por %p57, %p58
    %p61 = scmp.ne.s32.totalorder %s46, %s60
    %p62 = scmp.eq.s32.totalorder %s15, 0
    %p63 = por %p61, %p62
    %s65 = sadd.s32 %s64, 1
    %p68 = scmp.eq.s32.totalorder %s9, 1
    %p69 = scmp.ne.s32.totalorder %s64, %s66
    %p70 = scmp.eq.s32.totalorder %s9, 0
    %p71 = por %p69, %p70
    %p72 = scmp.ne.s32.totalorder %s64, %s66
    %p73 = scmp.eq.s32.totalorder %s14, 1
    %p74 = por %p72, %p73
    %p75 = scmp.ne.s32.totalorder %s66, %s67
    %p76 = scmp.eq.s32.totalorder %s14, 0
    %p77 = por %p75, %p76
    %p78 = scmp.ne.s32.totalorder %s66, %s67
    %p79 = scmp.eq.s32.totalorder %s15, 1
    %p80 = por %p78, %p79
    %p82 = scmp.ne.s32.totalorder %s67, %s81
    %p83 = scmp.eq.s32.totalorder %s15, 0
    %p84 = por %p82, %p83
    %s85 = ssub.s32 %s9, %s16
    %p86 = scmp.eq.s32.totalorder %s85, 0
    %s88 = sadd.s32 %s87, 1
    %s89 = scalar_select %p86, %s87, %s88
    %p92 = pneg %p86
    %p93 = scmp.eq.s32.totalorder %s9, 1
    %p94 = por %p92, %p93
    %p95 = scmp.ne.s32.totalorder %s87, %s90
    %p96 = scmp.eq.s32.totalorder %s9, 0
    %p97 = por %p95, %p96
    %p98 = scmp.ne.s32.totalorder %s87, %s90
    %p99 = scmp.eq.s32.totalorder %s14, 1
    %p100 = por %p98, %p99
    %p101 = scmp.ne.s32.totalorder %s90, %s91
    %p102 = scmp.eq.s32.totalorder %s14, 0
    %p103 = por %p101, %p102
    %p104 = scmp.ne.s32.totalorder %s90, %s91
    %p105 = scmp.eq.s32.totalorder %s15, 1
    %p106 = por %p104, %p105
    %p108 = scmp.ne.s32.totalorder %s91, %s107
    %p109 = scmp.eq.s32.totalorder %s15, 0
    %p110 = por %p108, %p109
    %p111 = scmp.le.s32.totalorder 1, %s9
    %p112 = scmp.lt.s32.totalorder %s9, 3
    %p113 = pnand %p111, %p112
    %p114 = pneg %p113
    // Predicated region
    $region9: #{effnet_forward.2} parent=5 // pred_check
      _
    $region10: #{effnet_forward.2} parent=5 // pred_check_branch
      %116 = sbr.rel (%p113) target = $region12
    $region11: #{effnet_forward.2} parent=5 // pred_region
      %s117 = ssub.s32 %s9, 1
      // Predicated region
      $region13: #{effnet_forward.2} parent=11 // pred_check
        %p118 = pneg %p56
      $region14: #{effnet_forward.2} parent=11 // pred_check_branch
        %120 = sbr.rel (%p118) target = $region16
      $region15: #{effnet_forward.2} parent=11 // pred_region
        _
      $region16: #{effnet_forward.2} parent=11 // pred_fallthru
        _
      // Predicated region
      $region17: #{effnet_forward.2} parent=11 // pred_check
        %p121 = pneg %p77
      $region18: #{effnet_forward.2} parent=11 // pred_check_branch
        %123 = sbr.rel (%p121) target = $region20
      $region19: #{effnet_forward.2} parent=11 // pred_region
        _
      $region20: #{effnet_forward.2} parent=11 // pred_fallthru
        _
    $region12: #{effnet_forward.2} parent=5 // pred_fallthru
      _
    %p124 = scmp.lt.s32.totalorder %s9, 2
    // Predicated region
    $region21: #{effnet_forward.2} parent=5 // pred_check
      %p125 = pneg %p124
    $region22: #{effnet_forward.2} parent=5 // pred_check_branch
      %127 = sbr.rel (%p125) target = $region24
    $region23: #{effnet_forward.2} parent=5 // pred_region
      // Predicated region
      $region25: #{effnet_forward.2} parent=23 // pred_check
        %p128 = pneg %p29
      $region26: #{effnet_forward.2} parent=23 // pred_check_branch
        %130 = sbr.rel (%p128) target = $region28
      $region27: #{effnet_forward.2} parent=23 // pred_region
        %p131 = scmp.lt.s32.totalorder %s9, 1
        %s132 = scalar_select %p131, %s9, 1
        %s133 = smul.addr %s132, 8
        %s134 = smul.addr %s133, 4
        %s135 = scalar_lea.vmem %s0, %s134
      $region28: #{effnet_forward.2} parent=23 // pred_fallthru
        _
    $region24: #{effnet_forward.2} parent=5 // pred_fallthru
      _
    %p136 = scmp.le.s32.totalorder 1, %s9
    %p137 = scmp.lt.s32.totalorder %s9, 3
    %p138 = pnand %p136, %p137
    %p139 = pneg %p138
    // Predicated region
    $region29: #{effnet_forward.2} parent=5 // pred_check
      _
    $region30: #{effnet_forward.2} parent=5 // pred_check_branch
      %141 = sbr.rel (%p138) target = $region32
    $region31: #{effnet_forward.2} parent=5 // pred_region
      %s142 = ssub.s32 %s9, 1
      %p143 = scmp.lt.s32.totalorder %s14, 1
      %s144 = scalar_select %p143, %s14, 1
      %s145 = smul.addr %s144, 8
      %s146 = smul.addr %s145, 4
      %s147 = scalar_lea.vmem %s0, %s146
      %p148 = pneg %p35
      %p149 = pneg %p32
      %p150 = pneg %p56
      %p151 = pneg %p53
      %p152 = pneg %p77
      %p153 = pneg %p74
      %p154 = pneg %p103
      %p155 = pneg %p100
      %p156 = scmp.lt.s32.totalorder %s14, 1
      %s157 = scalar_select %p156, %s14, 1
      %s158 = smul.addr %s157, 20
      %s159 = smul.addr %s158, 4
      %s160 = scalar_lea.vmem %s3, %s159
      %p161 = scmp.lt.s32.totalorder %s14, 1
      %s162 = scalar_select %p161, %s14, 1
      %s163 = smul.addr %s162, 8
      %s164 = smul.addr %s163, 4
      %s165 = scalar_lea.vmem %s0, %s164
      %p166 = scmp.lt.s32.totalorder %s14, 1
      %s167 = scalar_select %p166, %s14, 1
      %s168 = smul.addr %s167, 20
      %s169 = smul.addr %s168, 4
      %s170 = scalar_lea.vmem %s3, %s169
      %v172 = vld [vmem:[%s165] sm:$0xf]
      %v173 = vld [vmem:[%s165 + $0x4] sm:$0xf]
      %v174 = vld [vmem:[%s165 + $0x8] sm:$0xf]
      %v175 = vld [vmem:[%s165 + $0xc] sm:$0xf]
      %v176 = vld [vmem:[%s165 + $0x10] sm:$0xf]
      %v177 = vld [vmem:[%s165 + $0x14] sm:$0xf]
      %v178 = vld [vmem:[%s165 + $0x18] sm:$0xf]
      %v179 = vld [vmem:[%s165 + $0x1c] sm:$0xf]
      %v180 = vld [vmem:[%s1] sm:$0xf]
      %v181 = vld [vmem:[%s1 + $0x4] sm:$0xf]
      %v182 = vld [vmem:[%s1 + $0x8] sm:$0xf]
      %v183 = vld [vmem:[%s1 + $0xc] sm:$0x3]
      %v184 = vld [vmem:[%s2] sm:$0x1]
      %v186 = vlaneseq
      %v187 = vshrl.u32 %v186, 7
      %v188 = vsub.s32 0, %v187
      %v189 = vrot.slane %v184, %v188
      %v199 = vunpack.c.l.b16 %v172
      %v200 = vunpack.c.l.b16 %v173
      %v201 = vunpack.c.l.b16 %v174
      %v202 = vunpack.c.l.b16 %v175
      %v203 = vunpack.c.l.b16 %v176
      %v204 = vunpack.c.l.b16 %v177
      %v205 = vunpack.c.l.b16 %v178
      %v206 = vunpack.c.l.b16 %v179
      %v207 = vpack.c.b16 %v200, %v199
      %v208 = vpack.c.b16 %v202, %v201
      %v209 = vpack.c.b16 %v204, %v203
      %v210 = vpack.c.b16 %v206, %v205
      %v215 = vunpack.c.l.b16 %v180
      %v216 = vunpack.c.l.b16 %v181
      %v217 = vunpack.c.l.b16 %v182
      %v218 = vunpack.c.l.b16 %v183
      %v219 = vpack.c.b16 %v216, %v215
      %v220 = vpack.c.b16 %v218, %v217
      %vm222 = vcmask 220160
      %v224 = vsel %vm222, %v207, 0
      %v227 = vsel %vm222, %v208, 0
      %v230 = vsel %vm222, %v209, 0
      %v233 = vsel %vm222, %v210, 0
      %vm235 = vcmask 1044480
      %vm236 = vcmask 1045504
      %v237 = vsel %vm235, 4294967295, 65535
      %v238 = vsel %vm236, %v237, 0
      %v240 = vand.u32 %v220, %v238
      %242 = vmatprep.subr.bf16.mxu0 0
      %243 = vmatpush1.bf16.msra.mxu0 0
      %244 = vmatprep.subr.bf16.mxu0 0
      %245 = vmatpush1.bf16.msra.mxu0 0
      %246 = vmatprep.subr.bf16.mxu0 0
      %247 = vmatpush1.bf16.msra.mxu0 0
      %248 = vmatprep.subr.bf16.mxu0 0
      %249 = vmatpush1.bf16.msra.mxu0 0
      %250 = vmatprep.subr.bf16.mxu0 0
      %251 = vmatpush1.bf16.msra.mxu0 0
      %252 = vmatprep.subr.bf16.mxu0 0
      %253 = vmatpush1.bf16.msra.mxu0 0
      %254 = vmatprep.subr.bf16.mxu0 0
      %255 = vmatpush1.bf16.msra.mxu0 %v240
      %256 = vmatprep.subr.bf16.mxu0 0
      %257 = vmatpush1.bf16.msra.mxu0 %v219
      %258 = vmatprep.subr.bf16.mxu0 0
      %259 = vmatpush2.bf16.msra.mxu0 0
      %260 = vmatprep.subr.bf16.mxu0 0
      %261 = vmatpush2.bf16.msra.mxu0 0
      %262 = vmatprep.subr.bf16.mxu0 0
      %263 = vmatpush2.bf16.msra.mxu0 0
      %264 = vmatprep.subr.bf16.mxu0 0
      %265 = vmatpush2.bf16.msra.mxu0 0
      %266 = vmatprep.subr.bf16.mxu0 0
      %267 = vmatpush2.bf16.msra.mxu0 0
      %268 = vmatprep.subr.bf16.mxu0 0
      %269 = vmatpush2.bf16.msra.mxu0 0
      %270 = vmatprep.subr.bf16.mxu0 0
      %271 = vmatpush2.bf16.msra.mxu0 0
      %272 = vmatprep.subr.bf16.mxu0 0
      %273 = vmatpush2.bf16.msra.mxu0 0
      %274 = vmatprep.mubr.bf16.mxu0 0
      %275 = vmatmul.mubr.bf16.gmra.mxu0 %v224
      %v276 = vpop.f32.mrf.mxu0
      %v277 = vadd.f32 %v189, %v276
      %v278 = vpop.f32.mrf.mxu0
      %v279 = vpop.f32.mrf.mxu0
      %v280 = vadd.f32 %v189, %v279
      %v281 = vpop.f32.mrf.mxu0
      %282 = vmatprep.mubr.bf16.mxu0 0
      %283 = vmatmul.mubr.bf16.gmra.mxu0 %v227
      %v284 = vpop.f32.mrf.mxu0
      %v285 = vadd.f32 %v189, %v284
      %v286 = vpop.f32.mrf.mxu0
      %v287 = vpop.f32.mrf.mxu0
      %v288 = vadd.f32 %v189, %v287
      %v289 = vpop.f32.mrf.mxu0
      %290 = vmatprep.mubr.bf16.mxu0 0
      %291 = vmatmul.mubr.bf16.gmra.mxu0 %v230
      %v292 = vpop.f32.mrf.mxu0
      %v293 = vadd.f32 %v189, %v292
      %v294 = vpop.f32.mrf.mxu0
      %v295 = vpop.f32.mrf.mxu0
      %v296 = vadd.f32 %v189, %v295
      %v297 = vpop.f32.mrf.mxu0
      %298 = vmatprep.mubr.bf16.mxu0 0
      %299 = vmatmul.mubr.bf16.gmra.mxu0 %v233
      %v300 = vpop.f32.mrf.mxu0
      %v301 = vadd.f32 %v189, %v300
      %v302 = vpop.f32.mrf.mxu0
      %v303 = vpop.f32.mrf.mxu0
      %v304 = vadd.f32 %v189, %v303
      %v305 = vpop.f32.mrf.mxu0
      %306 = vdwg.mxu0
      %v307 = vxor.u32 %v277, 2147483648
      %v308 = vxor.u32 %v280, 2147483648
      %v309 = vxor.u32 %v285, 2147483648
      %v310 = vxor.u32 %v288, 2147483648
      %v311 = vxor.u32 %v293, 2147483648
      %v312 = vxor.u32 %v296, 2147483648
      %v313 = vxor.u32 %v301, 2147483648
      %v314 = vxor.u32 %v304, 2147483648
      %v315 = vmul.f32 %v307, 1.442695
      %v316 = vpow.pop %v315
      %v317 = vmul.f32 %v308, 1.442695
      %v318 = vpow.pop %v317
      %v319 = vmul.f32 %v309, 1.442695
      %v320 = vpow.pop %v319
      %v321 = vmul.f32 %v310, 1.442695
      %v322 = vpow.pop %v321
      %v323 = vmul.f32 %v311, 1.442695
      %v324 = vpow.pop %v323
      %v325 = vmul.f32 %v312, 1.442695
      %v326 = vpow.pop %v325
      %v327 = vmul.f32 %v313, 1.442695
      %v328 = vpow.pop %v327
      %v329 = vmul.f32 %v314, 1.442695
      %v330 = vpow.pop %v329
      %v331 = vadd.f32 %v316, 1.0
      %v332 = vadd.f32 %v318, 1.0
      %v333 = vadd.f32 %v320, 1.0
      %v334 = vadd.f32 %v322, 1.0
      %v335 = vadd.f32 %v324, 1.0
      %v336 = vadd.f32 %v326, 1.0
      %v337 = vadd.f32 %v328, 1.0
      %v338 = vadd.f32 %v330, 1.0
      %v339 = vrcp.pop %v331
      %v340 = vmul.f32 1.0, %v339
      %v341 = vrcp.pop %v332
      %v342 = vmul.f32 1.0, %v341
      %v343 = vrcp.pop %v333
      %v344 = vmul.f32 1.0, %v343
      %v345 = vrcp.pop %v334
      %v346 = vmul.f32 1.0, %v345
      %v347 = vrcp.pop %v335
      %v348 = vmul.f32 1.0, %v347
      %v349 = vrcp.pop %v336
      %v350 = vmul.f32 1.0, %v349
      %v351 = vrcp.pop %v337
      %v352 = vmul.f32 1.0, %v351
      %v353 = vrcp.pop %v338
      %v354 = vmul.f32 1.0, %v353
      %v355 = vmul.f32 %v277, %v340
      %v356 = vmul.f32 %v280, %v342
      %v357 = vmul.f32 %v285, %v344
      %v358 = vmul.f32 %v288, %v346
      %v359 = vmul.f32 %v293, %v348
      %v360 = vmul.f32 %v296, %v350
      %v361 = vmul.f32 %v301, %v352
      %v362 = vmul.f32 %v304, %v354
      %v363 = vpack.c.bf16 %v355, %v355
      %v364 = vpack.c.bf16 %v356, %v356
      %v365 = vpack.c.bf16 %v357, %v357
      %v366 = vpack.c.bf16 %v358, %v358
      %v367 = vpack.c.bf16 %v359, %v359
      %v368 = vpack.c.bf16 %v360, %v360
      %v369 = vpack.c.bf16 %v361, %v361
      %v370 = vpack.c.bf16 %v362, %v362
      %vm371 = vcmask 257024
      %372 = vst.msk [vmem:[%s170] sm:$0xf] %vm371, 0
      %vm373 = vcmask 253952
      %374 = vst.msk [vmem:[%s170 + $0x4] sm:$0x1] %vm373, 0
      %375 = vst.msk [vmem:[%s170 + $0x8] sm:$0xf] %vm371, 0
      %376 = vst.msk [vmem:[%s170 + $0xc] sm:$0x1] %vm373, 0
      %377 = vst.msk [vmem:[%s170 + $0x10] sm:$0xf] %vm371, 0
      %378 = vst.msk [vmem:[%s170 + $0x14] sm:$0x1] %vm373, 0
      %379 = vst.msk [vmem:[%s170 + $0x18] sm:$0xf] %vm371, 0
      %380 = vst.msk [vmem:[%s170 + $0x1c] sm:$0x1] %vm373, 0
      %381 = vst.msk [vmem:[%s170 + $0x20] sm:$0xf] %vm371, 0
      %382 = vst.msk [vmem:[%s170 + $0x24] sm:$0x1] %vm373, 0
      %383 = vst.msk [vmem:[%s170 + $0x28] sm:$0xf] %vm371, 0
      %384 = vst.msk [vmem:[%s170 + $0x2c] sm:$0x1] %vm373, 0
      %385 = vst.msk [vmem:[%s170 + $0x30] sm:$0xf] %vm371, 0
      %386 = vst.msk [vmem:[%s170 + $0x34] sm:$0x1] %vm373, 0
      %387 = vst.msk [vmem:[%s170 + $0x38] sm:$0xf] %vm371, 0
      %388 = vst.msk [vmem:[%s170 + $0x3c] sm:$0x1] %vm373, 0
      %389 = vst.msk [vmem:[%s170 + $0x40] sm:$0xf] %vm371, 0
      %390 = vst.msk [vmem:[%s170 + $0x44] sm:$0x1] %vm373, 0
      %391 = vst.msk [vmem:[%s170 + $0x48] sm:$0xf] %vm371, 0
      %392 = vst.msk [vmem:[%s170 + $0x4c] sm:$0x1] %vm373, 0
      %v401 = vunpack.c.l.b16 %v363
      %v402 = vunpack.c.l.b16 %v364
      %v403 = vunpack.c.l.b16 %v365
      %v404 = vunpack.c.l.b16 %v366
      %v405 = vunpack.c.l.b16 %v367
      %v406 = vunpack.c.l.b16 %v368
      %v407 = vunpack.c.l.b16 %v369
      %v408 = vunpack.c.l.b16 %v370
      %v409 = vpack.c.b16 %v401, %v401
      %v410 = vpack.c.b16 %v402, %v402
      %v411 = vpack.c.b16 %v403, %v403
      %v412 = vpack.c.b16 %v404, %v404
      %v413 = vpack.c.b16 %v405, %v405
      %v414 = vpack.c.b16 %v406, %v406
      %v415 = vpack.c.b16 %v407, %v407
      %v416 = vpack.c.b16 %v408, %v408
      %v418 = vshrl.u32 %v409, 16
      %v420 = vrot.slane %v418, 7
      %v421 = vshll.u32 %v409, 16
      %v423 = vor.u32 %v420, %v421
      %v424 = vrot.slane %v420, 4
      %v426 = vshrl.u32 %v410, 16
      %v428 = vrot.slane %v426, 7
      %v429 = vshll.u32 %v410, 16
      %v431 = vor.u32 %v428, %v429
      %v432 = vrot.slane %v428, 4
      %v434 = vshrl.u32 %v411, 16
      %v436 = vrot.slane %v434, 7
      %v437 = vshll.u32 %v411, 16
      %v439 = vor.u32 %v436, %v437
      %v440 = vrot.slane %v436, 4
      %v442 = vshrl.u32 %v412, 16
      %v444 = vrot.slane %v442, 7
      %v445 = vshll.u32 %v412, 16
      %v447 = vor.u32 %v444, %v445
      %v448 = vrot.slane %v444, 4
      %v450 = vshrl.u32 %v413, 16
      %v452 = vrot.slane %v450, 7
      %v453 = vshll.u32 %v413, 16
      %v455 = vor.u32 %v452, %v453
      %v456 = vrot.slane %v452, 4
      %v458 = vshrl.u32 %v414, 16
      %v460 = vrot.slane %v458, 7
      %v461 = vshll.u32 %v414, 16
      %v463 = vor.u32 %v460, %v461
      %v464 = vrot.slane %v460, 4
      %v466 = vshrl.u32 %v415, 16
      %v468 = vrot.slane %v466, 7
      %v469 = vshll.u32 %v415, 16
      %v471 = vor.u32 %v468, %v469
      %v472 = vrot.slane %v468, 4
      %v474 = vshrl.u32 %v416, 16
      %v476 = vrot.slane %v474, 7
      %v477 = vshll.u32 %v416, 16
      %v479 = vor.u32 %v476, %v477
      %v480 = vrot.slane %v476, 4
      %s497 = scalar_lea.vmem %s170, 8
      %vm498 = vcmask 257024
      %vm499 = vsmask.f32 7938
      %vm500 = vmand %vm498, %vm499
      %v501 = vld [vmem:[%s497] sm:$0xf]
      %v502 = vsel %vm500, %v423, %v501
      %503 = vst [vmem:[%s497] sm:$0xf] %v502
      %vm504 = vcmask 253952
      %vm505 = vsmask.f32 256
      %vm506 = vmand %vm504, %vm505
      %v507 = vld [vmem:[%s497 + $0x4] sm:$0x1]
      %v508 = vsel %vm506, %v424, %v507
      %509 = vst [vmem:[%s497 + $0x4] sm:$0x1] %v508
      %v510 = vld [vmem:[%s497 + $0x8] sm:$0xf]
      %v511 = vsel %vm500, %v431, %v510
      %512 = vst [vmem:[%s497 + $0x8] sm:$0xf] %v511
      %v513 = vld [vmem:[%s497 + $0xc] sm:$0x1]
      %v514 = vsel %vm506, %v432, %v513
      %515 = vst [vmem:[%s497 + $0xc] sm:$0x1] %v514
      %v516 = vld [vmem:[%s497 + $0x10] sm:$0xf]
      %v517 = vsel %vm500, %v439, %v516
      %518 = vst [vmem:[%s497 + $0x10] sm:$0xf] %v517
      %v519 = vld [vmem:[%s497 + $0x14] sm:$0x1]
      %v520 = vsel %vm506, %v440, %v519
      %521 = vst [vmem:[%s497 + $0x14] sm:$0x1] %v520
      %v522 = vld [vmem:[%s497 + $0x18] sm:$0xf]
      %v523 = vsel %vm500, %v447, %v522
      %524 = vst [vmem:[%s497 + $0x18] sm:$0xf] %v523
      %v525 = vld [vmem:[%s497 + $0x1c] sm:$0x1]
      %v526 = vsel %vm506, %v448, %v525
      %527 = vst [vmem:[%s497 + $0x1c] sm:$0x1] %v526
      %v528 = vld [vmem:[%s497 + $0x20] sm:$0xf]
      %v529 = vsel %vm500, %v455, %v528
      %530 = vst [vmem:[%s497 + $0x20] sm:$0xf] %v529
      %v531 = vld [vmem:[%s497 + $0x24] sm:$0x1]
      %v532 = vsel %vm506, %v456, %v531
      %533 = vst [vmem:[%s497 + $0x24] sm:$0x1] %v532
      %v534 = vld [vmem:[%s497 + $0x28] sm:$0xf]
      %v535 = vsel %vm500, %v463, %v534
      %536 = vst [vmem:[%s497 + $0x28] sm:$0xf] %v535
      %v537 = vld [vmem:[%s497 + $0x2c] sm:$0x1]
      %v538 = vsel %vm506, %v464, %v537
      %539 = vst [vmem:[%s497 + $0x2c] sm:$0x1] %v538
      %v540 = vld [vmem:[%s497 + $0x30] sm:$0xf]
      %v541 = vsel %vm500, %v471, %v540
      %542 = vst [vmem:[%s497 + $0x30] sm:$0xf] %v541
      %v543 = vld [vmem:[%s497 + $0x34] sm:$0x1]
      %v544 = vsel %vm506, %v472, %v543
      %545 = vst [vmem:[%s497 + $0x34] sm:$0x1] %v544
      %v546 = vld [vmem:[%s497 + $0x38] sm:$0xf]
      %v547 = vsel %vm500, %v479, %v546
      %548 = vst [vmem:[%s497 + $0x38] sm:$0xf] %v547
      %v549 = vld [vmem:[%s497 + $0x3c] sm:$0x1]
      %v550 = vsel %vm506, %v480, %v549
      %551 = vst [vmem:[%s497 + $0x3c] sm:$0x1] %v550
      %p552 = scmp.lt.s32.totalorder %s14, 1
      %s553 = scalar_select %p552, %s14, 1
      %s554 = smul.addr %s553, 20
      %s555 = smul.addr %s554, 4
      %s556 = scalar_lea.vmem %s3, %s555
      // Predicated region
      $region33: #{effnet_forward.2} parent=31 // pred_check
        %p557 = pneg %p100
      $region34: #{effnet_forward.2} parent=31 // pred_check_branch
        %559 = sbr.rel (%p557) target = $region36
      $region35: #{effnet_forward.2} parent=31 // pred_region
        _
      $region36: #{effnet_forward.2} parent=31 // pred_fallthru
        _
    $region32: #{effnet_forward.2} parent=5 // pred_fallthru
      _
    %p560 = scmp.le.s32.totalorder 2, %s9
    // Predicated region
    $region37: #{effnet_forward.2} parent=5 // pred_check
      %p561 = pneg %p560
    $region38: #{effnet_forward.2} parent=5 // pred_check_branch
      %563 = sbr.rel (%p561) target = $region40
    $region39: #{effnet_forward.2} parent=5 // pred_region
      %s564 = ssub.s32 %s9, 2
      // Predicated region
      $region41: #{effnet_forward.2} parent=39 // pred_check
        %p565 = pneg %p106
      $region42: #{effnet_forward.2} parent=39 // pred_check_branch
        %567 = sbr.rel (%p565) target = $region44
      $region43: #{effnet_forward.2} parent=39 // pred_region
        %p568 = scmp.lt.s32.totalorder %s15, 1
        %s569 = scalar_select %p568, %s15, 1
        %s570 = smul.addr %s569, 20
        %s571 = smul.addr %s570, 4
        %s572 = scalar_lea.vmem %s3, %s571
      $region44: #{effnet_forward.2} parent=39 // pred_fallthru
        _
    $region40: #{effnet_forward.2} parent=5 // pred_fallthru
      _
  $region6: #{effnet_forward.2} parent=0 // loop_footer
    %s13 = sadd.s32 1, %s9
  $region7: #{effnet_forward.2} parent=0 // loop_footer_branch
    %8 = sbr.rel target = $region3
  $region8: #{effnet_forward.2} parent=0 // loop_exit
    _

// kernel: effnet_forward.3
$region0: #{effnet_forward.3}
  #allocation0 [shape = 'u32[]', space=smem, size = 0x4, offset = 0x4, fixed_abs, tag = 'smem constant byte address 0x4 - core index']
  #allocation1 [shape = 'u32[144,128]{1,0:T(1,128)}', space=vmem, size = 0x12000, scoped, tag = 'internal scratch']
  %s0 = inlined_call_operand.vmem [shape: bf16[2,10,10,32], index: 0, kind: input, shape index: {}]
  %s1 = inlined_call_operand.vmem [shape: f32[3,3,32], index: 1, kind: input, shape index: {}]
  %s2 = inlined_call_operand.vmem [shape: f32[1,32], index: 2, kind: input, shape index: {}]
  %s3 = inlined_call_operand.vmem [shape: f32[8,32], index: 3, kind: input, shape index: {}]
  %s4 = inlined_call_operand.vmem [shape: f32[8,1], index: 4, kind: input, shape index: {}]
  %s5 = inlined_call_operand.vmem [shape: f32[8,32], index: 5, kind: input, shape index: {}]
  %s6 = inlined_call_operand.vmem [shape: f32[1,32], index: 6, kind: input, shape index: {}]
  %s7 = inlined_call_operand.vmem [shape: bf16[32,128], index: 7, kind: input, shape index: {}]
  %s8 = inlined_call_operand.vmem [shape: f32[1,128], index: 8, kind: input, shape index: {}]
  %s9 = inlined_call_operand.hbm [shape: f32[2,1,128], index: 9, kind: output, shape index: {}]
  %s10 = sld [smem:[#allocation0]]
  $region69: #{effnet_forward.3} parent=0
    _
  %s12 = ssub.s32 1, %s10
  %s13 = scalar_select 0, %s12, %s10
  $region1: #{effnet_forward.3} parent=0
    #allocation2 [shape = 'u8[1024]{0}', space=vmem, size = 0x400, scoped, tag = 'output window, operand 0']
    #allocation3 [shape = 's32[2]{0}', space=sflag, size = 0x8, scoped, tag = 'scoped memory for effnet_forward.3']
    %14 = vsyncpa [#allocation3], 0
    %s15 = scalar_lea.sflag [#allocation3], 1
    %16 = vsyncpa %s15, 0
    loop: start=0, step=1, limit=4
    $region2: #{effnet_forward.3} parent=1 // loop_pre_header
      _
    $region3: #{effnet_forward.3} parent=1 // loop_header
      %s18 = sphi 0, %s22
      %p19 = scmp.ge.s32.totalorder %s18, 4
      %s28 = sphi 0, %s30
      %s31 = sphi 0, %s28
      %s32 = sphi 0, %s31
      %s48 = sphi 0, %s32
      %s52 = sphi 0, %s52
      %s54 = sphi 0, %s52
      %s55 = sphi 0, %s54
      %s69 = sphi 0, %s55
      %s73 = sphi 0, %s73
      %s75 = sphi 0, %s73
      %s76 = sphi 0, %s75
      %s90 = sphi 0, %s76
      %s94 = sphi 0, %s94
      %s96 = sphi 0, %s94
      %s97 = sphi 0, %s96
      %s111 = sphi 0, %s97
      %s115 = sphi 0, %s115
      %s117 = sphi 0, %s115
      %s118 = sphi 0, %s117
      %s132 = sphi 0, %s118
      %s136 = sphi 0, %s136
      %s138 = sphi 0, %s136
      %s139 = sphi 0, %s138
      %s153 = sphi 0, %s139
      %s157 = sphi 0, %s157
      %s159 = sphi 0, %s157
      %s160 = sphi 0, %s159
      %s174 = sphi 0, %s160
      %s178 = sphi 0, %s178
      %s180 = sphi 0, %s178
      %s181 = sphi 0, %s180
      %s195 = sphi 0, %s181
      %s199 = sphi 0, %s199
      %s201 = sphi 0, %s199
      %s202 = sphi 0, %s201
      %s216 = sphi 0, %s202
      %s222 = sphi 0, %s224
      %s225 = sphi 0, %s222
      %s226 = sphi 0, %s225
      %s242 = sphi 0, %s226
    $region4: #{effnet_forward.3} parent=1 // loop_header_branch
      %21 = sbr.rel (%p19) target = $region8
    $region5: #{effnet_forward.3} parent=1 // loop_body
      %s23 = ssub.s32 %s18, 1
      %s24 = ssub.s32 %s18, 2
      %s25 = sadd.s32 %s18, 1
      %s26 = ssub.s32 %s18, %s25
      %p27 = scmp.eq.s32.totalorder %s26, 0
      %s29 = sadd.s32 %s28, 1
      %s30 = scalar_select %p27, %s28, %s29
      %p33 = pneg %p27
      %p34 = scmp.eq.s32.totalorder %s18, 1
      %p35 = por %p33, %p34
      %p36 = scmp.ne.s32.totalorder %s28, %s31
      %p37 = scmp.eq.s32.totalorder %s18, 0
      %p38 = por %p36, %p37
      %p39 = scmp.ne.s32.totalorder %s28, %s31
      %p40 = scmp.eq.s32.totalorder %s23, 1
      %p41 = por %p39, %p40
      %p42 = scmp.ne.s32.totalorder %s31, %s32
      %p43 = scmp.eq.s32.totalorder %s23, 0
      %p44 = por %p42, %p43
      %p45 = scmp.ne.s32.totalorder %s31, %s32
      %p46 = scmp.eq.s32.totalorder %s24, 1
      %p47 = por %p45, %p46
      %p49 = scmp.ne.s32.totalorder %s32, %s48
      %p50 = scmp.eq.s32.totalorder %s24, 0
      %p51 = por %p49, %p50
      %s53 = sadd.s32 %s52, 1
      %p56 = scmp.eq.s32.totalorder %s18, 1
      %p57 = scmp.ne.s32.totalorder %s52, %s54
      %p58 = scmp.eq.s32.totalorder %s18, 0
      %p59 = por %p57, %p58
      %p60 = scmp.ne.s32.totalorder %s52, %s54
      %p61 = scmp.eq.s32.totalorder %s23, 1
      %p62 = por %p60, %p61
      %p63 = scmp.ne.s32.totalorder %s54, %s55
      %p64 = scmp.eq.s32.totalorder %s23, 0
      %p65 = por %p63, %p64
      %p66 = scmp.ne.s32.totalorder %s54, %s55
      %p67 = scmp.eq.s32.totalorder %s24, 1
      %p68 = por %p66, %p67
      %p70 = scmp.ne.s32.totalorder %s55, %s69
      %p71 = scmp.eq.s32.totalorder %s24, 0
      %p72 = por %p70, %p71
      %s74 = sadd.s32 %s73, 1
      %p77 = scmp.eq.s32.totalorder %s18, 1
      %p78 = scmp.ne.s32.totalorder %s73, %s75
      %p79 = scmp.eq.s32.totalorder %s18, 0
      %p80 = por %p78, %p79
      %p81 = scmp.ne.s32.totalorder %s73, %s75
      %p82 = scmp.eq.s32.totalorder %s23, 1
      %p83 = por %p81, %p82
      %p84 = scmp.ne.s32.totalorder %s75, %s76
      %p85 = scmp.eq.s32.totalorder %s23, 0
      %p86 = por %p84, %p85
      %p87 = scmp.ne.s32.totalorder %s75, %s76
      %p88 = scmp.eq.s32.totalorder %s24, 1
      %p89 = por %p87, %p88
      %p91 = scmp.ne.s32.totalorder %s76, %s90
      %p92 = scmp.eq.s32.totalorder %s24, 0
      %p93 = por %p91, %p92
      %s95 = sadd.s32 %s94, 1
      %p98 = scmp.eq.s32.totalorder %s18, 1
      %p99 = scmp.ne.s32.totalorder %s94, %s96
      %p100 = scmp.eq.s32.totalorder %s18, 0
      %p101 = por %p99, %p100
      %p102 = scmp.ne.s32.totalorder %s94, %s96
      %p103 = scmp.eq.s32.totalorder %s23, 1
      %p104 = por %p102, %p103
      %p105 = scmp.ne.s32.totalorder %s96, %s97
      %p106 = scmp.eq.s32.totalorder %s23, 0
      %p107 = por %p105, %p106
      %p108 = scmp.ne.s32.totalorder %s96, %s97
      %p109 = scmp.eq.s32.totalorder %s24, 1
      %p110 = por %p108, %p109
      %p112 = scmp.ne.s32.totalorder %s97, %s111
      %p113 = scmp.eq.s32.totalorder %s24, 0
      %p114 = por %p112, %p113
      %s116 = sadd.s32 %s115, 1
      %p119 = scmp.eq.s32.totalorder %s18, 1
      %p120 = scmp.ne.s32.totalorder %s115, %s117
      %p121 = scmp.eq.s32.totalorder %s18, 0
      %p122 = por %p120, %p121
      %p123 = scmp.ne.s32.totalorder %s115, %s117
      %p124 = scmp.eq.s32.totalorder %s23, 1
      %p125 = por %p123, %p124
      %p126 = scmp.ne.s32.totalorder %s117, %s118
      %p127 = scmp.eq.s32.totalorder %s23, 0
      %p128 = por %p126, %p127
      %p129 = scmp.ne.s32.totalorder %s117, %s118
      %p130 = scmp.eq.s32.totalorder %s24, 1
      %p131 = por %p129, %p130
      %p133 = scmp.ne.s32.totalorder %s118, %s132
      %p134 = scmp.eq.s32.totalorder %s24, 0
      %p135 = por %p133, %p134
      %s137 = sadd.s32 %s136, 1
      %p140 = scmp.eq.s32.totalorder %s18, 1
      %p141 = scmp.ne.s32.totalorder %s136, %s138
      %p142 = scmp.eq.s32.totalorder %s18, 0
      %p143 = por %p141, %p142
      %p144 = scmp.ne.s32.totalorder %s136, %s138
      %p145 = scmp.eq.s32.totalorder %s23, 1
      %p146 = por %p144, %p145
      %p147 = scmp.ne.s32.totalorder %s138, %s139
      %p148 = scmp.eq.s32.totalorder %s23, 0
      %p149 = por %p147, %p148
      %p150 = scmp.ne.s32.totalorder %s138, %s139
      %p151 = scmp.eq.s32.totalorder %s24, 1
      %p152 = por %p150, %p151
      %p154 = scmp.ne.s32.totalorder %s139, %s153
      %p155 = scmp.eq.s32.totalorder %s24, 0
      %p156 = por %p154, %p155
      %s158 = sadd.s32 %s157, 1
      %p161 = scmp.eq.s32.totalorder %s18, 1
      %p162 = scmp.ne.s32.totalorder %s157, %s159
      %p163 = scmp.eq.s32.totalorder %s18, 0
      %p164 = por %p162, %p163
      %p165 = scmp.ne.s32.totalorder %s157, %s159
      %p166 = scmp.eq.s32.totalorder %s23, 1
      %p167 = por %p165, %p166
      %p168 = scmp.ne.s32.totalorder %s159, %s160
      %p169 = scmp.eq.s32.totalorder %s23, 0
      %p170 = por %p168, %p169
      %p171 = scmp.ne.s32.totalorder %s159, %s160
      %p172 = scmp.eq.s32.totalorder %s24, 1
      %p173 = por %p171, %p172
      %p175 = scmp.ne.s32.totalorder %s160, %s174
      %p176 = scmp.eq.s32.totalorder %s24, 0
      %p177 = por %p175, %p176
      %s179 = sadd.s32 %s178, 1
      %p182 = scmp.eq.s32.totalorder %s18, 1
      %p183 = scmp.ne.s32.totalorder %s178, %s180
      %p184 = scmp.eq.s32.totalorder %s18, 0
      %p185 = por %p183, %p184
      %p186 = scmp.ne.s32.totalorder %s178, %s180
      %p187 = scmp.eq.s32.totalorder %s23, 1
      %p188 = por %p186, %p187
      %p189 = scmp.ne.s32.totalorder %s180, %s181
      %p190 = scmp.eq.s32.totalorder %s23, 0
      %p191 = por %p189, %p190
      %p192 = scmp.ne.s32.totalorder %s180, %s181
      %p193 = scmp.eq.s32.totalorder %s24, 1
      %p194 = por %p192, %p193
      %p196 = scmp.ne.s32.totalorder %s181, %s195
      %p197 = scmp.eq.s32.totalorder %s24, 0
      %p198 = por %p196, %p197
      %s200 = sadd.s32 %s199, 1
      %p203 = scmp.eq.s32.totalorder %s18, 1
      %p204 = scmp.ne.s32.totalorder %s199, %s201
      %p205 = scmp.eq.s32.totalorder %s18, 0
      %p206 = por %p204, %p205
      %p207 = scmp.ne.s32.totalorder %s199, %s201
      %p208 = scmp.eq.s32.totalorder %s23, 1
      %p209 = por %p207, %p208
      %p210 = scmp.ne.s32.totalorder %s201, %s202
      %p211 = scmp.eq.s32.totalorder %s23, 0
      %p212 = por %p210, %p211
      %p213 = scmp.ne.s32.totalorder %s201, %s202
      %p214 = scmp.eq.s32.totalorder %s24, 1
      %p215 = por %p213, %p214
      %p217 = scmp.ne.s32.totalorder %s202, %s216
      %p218 = scmp.eq.s32.totalorder %s24, 0
      %p219 = por %p217, %p218
      %s220 = ssub.s32 %s18, %s25
      %p221 = scmp.eq.s32.totalorder %s220, 0
      %s223 = sadd.s32 %s222, 1
      %s224 = scalar_select %p221, %s222, %s223
      %p227 = pneg %p221
      %p228 = scmp.eq.s32.totalorder %s18, 1
      %p229 = por %p227, %p228
      %p230 = scmp.ne.s32.totalorder %s222, %s225
      %p231 = scmp.eq.s32.totalorder %s18, 0
      %p232 = por %p230, %p231
      %p233 = scmp.ne.s32.totalorder %s222, %s225
      %p234 = scmp.eq.s32.totalorder %s23, 1
      %p235 = por %p233, %p234
      %p236 = scmp.ne.s32.totalorder %s225, %s226
      %p237 = scmp.eq.s32.totalorder %s23, 0
      %p238 = por %p236, %p237
      %p239 = scmp.ne.s32.totalorder %s225, %s226
      %p240 = scmp.eq.s32.totalorder %s24, 1
      %p241 = por %p239, %p240
      %p243 = scmp.ne.s32.totalorder %s226, %s242
      %p244 = scmp.eq.s32.totalorder %s24, 0
      %p245 = por %p243, %p244
      %p246 = scmp.le.s32.totalorder 1, %s18
      %p247 = scmp.lt.s32.totalorder %s18, 3
      %p248 = pnand %p246, %p247
      %p249 = pneg %p248
      // Predicated region
      $region9: #{effnet_forward.3} parent=5 // pred_check
        _
      $region10: #{effnet_forward.3} parent=5 // pred_check_branch
        %251 = sbr.rel (%p248) target = $region12
      $region11: #{effnet_forward.3} parent=5 // pred_region
        %s252 = ssub.s32 %s18, 1
        // Predicated region
        $region13: #{effnet_forward.3} parent=11 // pred_check
          %p253 = pneg %p65
        $region14: #{effnet_forward.3} parent=11 // pred_check_branch
          %255 = sbr.rel (%p253) target = $region16
        $region15: #{effnet_forward.3} parent=11 // pred_region
          _
        $region16: #{effnet_forward.3} parent=11 // pred_fallthru
          _
        // Predicated region
        $region17: #{effnet_forward.3} parent=11 // pred_check
          %p256 = pneg %p86
        $region18: #{effnet_forward.3} parent=11 // pred_check_branch
          %258 = sbr.rel (%p256) target = $region20
        $region19: #{effnet_forward.3} parent=11 // pred_region
          _
        $region20: #{effnet_forward.3} parent=11 // pred_fallthru
          _
        // Predicated region
        $region21: #{effnet_forward.3} parent=11 // pred_check
          %p259 = pneg %p107
        $region22: #{effnet_forward.3} parent=11 // pred_check_branch
          %261 = sbr.rel (%p259) target = $region24
        $region23: #{effnet_forward.3} parent=11 // pred_region
          _
        $region24: #{effnet_forward.3} parent=11 // pred_fallthru
          _
        // Predicated region
        $region25: #{effnet_forward.3} parent=11 // pred_check
          %p262 = pneg %p128
        $region26: #{effnet_forward.3} parent=11 // pred_check_branch
          %264 = sbr.rel (%p262) target = $region28
        $region27: #{effnet_forward.3} parent=11 // pred_region
          _
        $region28: #{effnet_forward.3} parent=11 // pred_fallthru
          _
        // Predicated region
        $region29: #{effnet_forward.3} parent=11 // pred_check
          %p265 = pneg %p149
        $region30: #{effnet_forward.3} parent=11 // pred_check_branch
          %267 = sbr.rel (%p265) target = $region32
        $region31: #{effnet_forward.3} parent=11 // pred_region
          _
        $region32: #{effnet_forward.3} parent=11 // pred_fallthru
          _
        // Predicated region
        $region33: #{effnet_forward.3} parent=11 // pred_check
          %p268 = pneg %p170
        $region34: #{effnet_forward.3} parent=11 // pred_check_branch
          %270 = sbr.rel (%p268) target = $region36
        $region35: #{effnet_forward.3} parent=11 // pred_region
          _
        $region36: #{effnet_forward.3} parent=11 // pred_fallthru
          _
        // Predicated region
        $region37: #{effnet_forward.3} parent=11 // pred_check
          %p271 = pneg %p191
        $region38: #{effnet_forward.3} parent=11 // pred_check_branch
          %273 = sbr.rel (%p271) target = $region40
        $region39: #{effnet_forward.3} parent=11 // pred_region
          _
        $region40: #{effnet_forward.3} parent=11 // pred_fallthru
          _
        // Predicated region
        $region41: #{effnet_forward.3} parent=11 // pred_check
          %p274 = pneg %p212
        $region42: #{effnet_forward.3} parent=11 // pred_check_branch
          %276 = sbr.rel (%p274) target = $region44
        $region43: #{effnet_forward.3} parent=11 // pred_region
          _
        $region44: #{effnet_forward.3} parent=11 // pred_fallthru
          _
      $region12: #{effnet_forward.3} parent=5 // pred_fallthru
        _
      %p277 = scmp.lt.s32.totalorder %s18, 2
      // Predicated region
      $region45: #{effnet_forward.3} parent=5 // pred_check
        %p278 = pneg %p277
      $region46: #{effnet_forward.3} parent=5 // pred_check_branch
        %280 = sbr.rel (%p278) target = $region48
      $region47: #{effnet_forward.3} parent=5 // pred_region
        // Predicated region
        $region49: #{effnet_forward.3} parent=47 // pred_check
          %p281 = pneg %p38
        $region50: #{effnet_forward.3} parent=47 // pred_check_branch
          %283 = sbr.rel (%p281) target = $region52
        $region51: #{effnet_forward.3} parent=47 // pred_region
          %p284 = scmp.lt.s32.totalorder %s18, 1
          %s285 = scalar_select %p284, %s18, 1
          %s286 = smul.addr %s285, 20
          %s287 = smul.addr %s286, 4
          %s288 = scalar_lea.vmem %s0, %s287
        $region52: #{effnet_forward.3} parent=47 // pred_fallthru
          _
      $region48: #{effnet_forward.3} parent=5 // pred_fallthru
        _
      %p289 = scmp.le.s32.totalorder 1, %s18
      %p290 = scmp.lt.s32.totalorder %s18, 3
      %p291 = pnand %p289, %p290
      %p292 = pneg %p291
      // Predicated region
      $region53: #{effnet_forward.3} parent=5 // pred_check
        _
      $region54: #{effnet_forward.3} parent=5 // pred_check_branch
        %294 = sbr.rel (%p291) target = $region56
      $region55: #{effnet_forward.3} parent=5 // pred_region
        %s295 = ssub.s32 %s18, 1
        %p296 = scmp.lt.s32.totalorder %s23, 1
        %s297 = scalar_select %p296, %s23, 1
        %s298 = smul.addr %s297, 20
        %s299 = smul.addr %s298, 4
        %s300 = scalar_lea.vmem %s0, %s299
        %p301 = pneg %p44
        %p302 = pneg %p41
        %p303 = pneg %p65
        %p304 = pneg %p62
        %p305 = pneg %p86
        %p306 = pneg %p83
        %p307 = pneg %p107
        %p308 = pneg %p104
        %p309 = pneg %p128
        %p310 = pneg %p125
        %p311 = pneg %p149
        %p312 = pneg %p146
        %p313 = pneg %p170
        %p314 = pneg %p167
        %p315 = pneg %p191
        %p316 = pneg %p188
        %p317 = pneg %p212
        %p318 = pneg %p209
        %p319 = pneg %p238
        %p320 = pneg %p235
        %s321 = sand.u32 %s225, 1
        %s322 = scalar_lea.sflag [#allocation3], %s321
        %s323 = sand.u32 %s225, 1
        %s324 = scalar_lea.vmem [#allocation2], %s323
        %p325 = scmp.lt.s32.totalorder %s23, 1
        %s326 = scalar_select %p325, %s23, 1
        %s327 = smul.addr %s326, 20
        %s328 = smul.addr %s327, 4
        %s329 = scalar_lea.vmem %s0, %s328
        %v331 = vld [vmem:[%s329] sm:$0xf]
        %v332 = vld [vmem:[%s329 + $0x4] sm:$0x1]
        %v333 = vld [vmem:[%s329 + $0x8] sm:$0xf]
        %v334 = vld [vmem:[%s329 + $0xc] sm:$0x1]
        %v335 = vld [vmem:[%s329 + $0x10] sm:$0xf]
        %v336 = vld [vmem:[%s329 + $0x14] sm:$0x1]
        %v337 = vld [vmem:[%s329 + $0x18] sm:$0xf]
        %v338 = vld [vmem:[%s329 + $0x1c] sm:$0x1]
        %v339 = vld [vmem:[%s329 + $0x20] sm:$0xf]
        %v340 = vld [vmem:[%s329 + $0x24] sm:$0x1]
        %v341 = vld [vmem:[%s329 + $0x28] sm:$0xf]
        %v342 = vld [vmem:[%s329 + $0x2c] sm:$0x1]
        %v343 = vld [vmem:[%s329 + $0x30] sm:$0xf]
        %v344 = vld [vmem:[%s329 + $0x34] sm:$0x1]
        %v345 = vld [vmem:[%s329 + $0x38] sm:$0xf]
        %v346 = vld [vmem:[%s329 + $0x3c] sm:$0x1]
        %v347 = vld [vmem:[%s329 + $0x40] sm:$0xf]
        %v348 = vld [vmem:[%s329 + $0x44] sm:$0x1]
        %v349 = vld [vmem:[%s329 + $0x48] sm:$0xf]
        %v350 = vld [vmem:[%s329 + $0x4c] sm:$0x1]
        %v351 = vunpack.c.l.bf16 %v331
        %v352 = vunpack.c.l.bf16 %v332
        %v353 = vunpack.c.l.bf16 %v333
        %v354 = vunpack.c.l.bf16 %v334
        %v355 = vunpack.c.l.bf16 %v335
        %v356 = vunpack.c.l.bf16 %v336
        %v357 = vunpack.c.l.bf16 %v337
        %v358 = vunpack.c.l.bf16 %v338
        %v359 = vunpack.c.l.bf16 %v339
        %v360 = vunpack.c.l.bf16 %v340
        %v361 = vunpack.c.l.bf16 %v341
        %v362 = vunpack.c.l.bf16 %v342
        %v363 = vunpack.c.l.bf16 %v343
        %v364 = vunpack.c.l.bf16 %v344
        %v365 = vunpack.c.l.bf16 %v345
        %v366 = vunpack.c.l.bf16 %v346
        %v367 = vunpack.c.l.bf16 %v347
        %v368 = vunpack.c.l.bf16 %v348
        %v369 = vunpack.c.l.bf16 %v349
        %v370 = vunpack.c.l.bf16 %v350
        %v371 = vld [vmem:[%s1] sm:$0x7]
        %v372 = vld [vmem:[%s1 + $0x4] sm:$0x7]
        %v373 = vld [vmem:[%s1 + $0x8] sm:$0x7]
        %v374 = vlaneseq
        %v375 = vshrl.u32 %v374, 7
        %v376 = vsub.s32 0, %v375
        %v377 = vrot.slane %v371, %v376
        %v378 = vmul.f32 %v351, %v377
        %v379 = vmul.f32 %v353, %v377
        %v380 = vmul.f32 %v355, %v377
        %v381 = vmul.f32 %v357, %v377
        %v382 = vmul.f32 %v359, %v377
        %v383 = vmul.f32 %v361, %v377
        %v384 = vmul.f32 %v363, %v377
        %v385 = vmul.f32 %v365, %v377
        %v386 = vadd.f32 %v378, 0.0
        %v387 = vadd.f32 %v379, 0.0
        %v388 = vadd.f32 %v380, 0.0
        %v389 = vadd.f32 %v381, 0.0
        %v390 = vadd.f32 %v382, 0.0
        %v391 = vadd.f32 %v383, 0.0
        %v392 = vadd.f32 %v384, 0.0
        %v393 = vadd.f32 %v385, 0.0
        %v394 = vlaneseq
        %v395 = vshrl.u32 %v394, 7
        %v396 = vsub.s32 1, %v395
        %v397 = vrot.slane %v371, %v396
        %v398 = vmul.f32 %v351, %v397
        %v399 = vmul.f32 %v352, %v397
        %v400 = vmul.f32 %v353, %v397
        %v401 = vmul.f32 %v354, %v397
        %v402 = vmul.f32 %v355, %v397
        %v403 = vmul.f32 %v356, %v397
        %v404 = vmul.f32 %v357, %v397
        %v405 = vmul.f32 %v358, %v397
        %v406 = vmul.f32 %v359, %v397
        %v407 = vmul.f32 %v360, %v397
        %v408 = vmul.f32 %v361, %v397
        %v409 = vmul.f32 %v362, %v397
        %v410 = vmul.f32 %v363, %v397
        %v411 = vmul.f32 %v364, %v397
        %v412 = vmul.f32 %v365, %v397
        %v413 = vmul.f32 %v366, %v397
        %vm430 = vcmask 1046528
        %v431 = vrot.slane %v398, 1
        %v432 = vrot.slane %v399, 1
        %v433 = vsel %vm430, %v431, %v432
        %v434 = vrot.slane %v400, 1
        %v435 = vrot.slane %v401, 1
        %v436 = vsel %vm430, %v434, %v435
        %v437 = vrot.slane %v402, 1
        %v438 = vrot.slane %v403, 1
        %v439 = vsel %vm430, %v437, %v438
        %v440 = vrot.slane %v404, 1
        %v441 = vrot.slane %v405, 1
        %v442 = vsel %vm430, %v440, %v441
        %v443 = vrot.slane %v406, 1
        %v444 = vrot.slane %v407, 1
        %v445 = vsel %vm430, %v443, %v444
        %v446 = vrot.slane %v408, 1
        %v447 = vrot.slane %v409, 1
        %v448 = vsel %vm430, %v446, %v447
        %v449 = vrot.slane %v410, 1
        %v450 = vrot.slane %v411, 1
        %v451 = vsel %vm430, %v449, %v450
        %v452 = vrot.slane %v412, 1
        %v453 = vrot.slane %v413, 1
        %v454 = vsel %vm430, %v452, %v453
        %v463 = vadd.f32 %v386, %v433
        %v464 = vadd.f32 %v387, %v436
        %v465 = vadd.f32 %v388, %v439
        %v466 = vadd.f32 %v389, %v442
        %v467 = vadd.f32 %v390, %v445
        %v468 = vadd.f32 %v391, %v448
        %v469 = vadd.f32 %v392, %v451
        %v470 = vadd.f32 %v393, %v454
        %v471 = vlaneseq
        %v472 = vshrl.u32 %v471, 7
        %v473 = vsub.s32 2, %v472
        %v474 = vrot.slane %v371, %v473
        %v475 = vmul.f32 %v351, %v474
        %v476 = vmul.f32 %v352, %v474
        %v477 = vmul.f32 %v353, %v474
        %v478 = vmul.f32 %v354, %v474
        %v479 = vmul.f32 %v355, %v474
        %v480 = vmul.f32 %v356, %v474
        %v481 = vmul.f32 %v357, %v474
        %v482 = vmul.f32 %v358, %v474
        %v483 = vmul.f32 %v359, %v474
        %v484 = vmul.f32 %v360, %v474
        %v485 = vmul.f32 %v361, %v474
        %v486 = vmul.f32 %v362, %v474
        %v487 = vmul.f32 %v363, %v474
        %v488 = vmul.f32 %v364, %v474
        %v489 = vmul.f32 %v365, %v474
        %v490 = vmul.f32 %v366, %v474
        %vm507 = vcmask 1045504
        %v508 = vrot.slane %v475, 2
        %v509 = vrot.slane %v476, 2
        %v510 = vsel %vm507, %v508, %v509
        %v511 = vrot.slane %v477, 2
        %v512 = vrot.slane %v478, 2
        %v513 = vsel %vm507, %v511, %v512
        %v514 = vrot.slane %v479, 2
        %v515 = vrot.slane %v480, 2
        %v516 = vsel %vm507, %v514, %v515
        %v517 = vrot.slane %v481, 2
        %v518 = vrot.slane %v482, 2
        %v519 = vsel %vm507, %v517, %v518
        %v520 = vrot.slane %v483, 2
        %v521 = vrot.slane %v484, 2
        %v522 = vsel %vm507, %v520, %v521
        %v523 = vrot.slane %v485, 2
        %v524 = vrot.slane %v486, 2
        %v525 = vsel %vm507, %v523, %v524
        %v526 = vrot.slane %v487, 2
        %v527 = vrot.slane %v488, 2
        %v528 = vsel %vm507, %v526, %v527
        %v529 = vrot.slane %v489, 2
        %v530 = vrot.slane %v490, 2
        %v531 = vsel %vm507, %v529, %v530
        %v540 = vadd.f32 %v463, %v510
        %v541 = vadd.f32 %v464, %v513
        %v542 = vadd.f32 %v465, %v516
        %v543 = vadd.f32 %v466, %v519
        %v544 = vadd.f32 %v467, %v522
        %v545 = vadd.f32 %v468, %v525
        %v546 = vadd.f32 %v469, %v528
        %v547 = vadd.f32 %v470, %v531
        %v548 = vlaneseq
        %v549 = vshrl.u32 %v548, 7
        %v550 = vsub.s32 0, %v549
        %v551 = vrot.slane %v372, %v550
        %v552 = vmul.f32 %v353, %v551
        %v553 = vmul.f32 %v355, %v551
        %v554 = vmul.f32 %v357, %v551
        %v555 = vmul.f32 %v359, %v551
        %v556 = vmul.f32 %v361, %v551
        %v557 = vmul.f32 %v363, %v551
        %v558 = vmul.f32 %v365, %v551
        %v559 = vmul.f32 %v367, %v551
        %v560 = vadd.f32 %v540, %v552
        %v561 = vadd.f32 %v541, %v553
        %v562 = vadd.f32 %v542, %v554
        %v563 = vadd.f32 %v543, %v555
        %v564 = vadd.f32 %v544, %v556
        %v565 = vadd.f32 %v545, %v557
        %v566 = vadd.f32 %v546, %v558
        %v567 = vadd.f32 %v547, %v559
        %v568 = vlaneseq
        %v569 = vshrl.u32 %v568, 7
        %v570 = vsub.s32 1, %v569
        %v571 = vrot.slane %v372, %v570
        %v572 = vmul.f32 %v353, %v571
        %v573 = vmul.f32 %v354, %v571
        %v574 = vmul.f32 %v355, %v571
        %v575 = vmul.f32 %v356, %v571
        %v576 = vmul.f32 %v357, %v571
        %v577 = vmul.f32 %v358, %v571
        %v578 = vmul.f32 %v359, %v571
        %v579 = vmul.f32 %v360, %v571
        %v580 = vmul.f32 %v361, %v571
        %v581 = vmul.f32 %v362, %v571
        %v582 = vmul.f32 %v363, %v571
        %v583 = vmul.f32 %v364, %v571
        %v584 = vmul.f32 %v365, %v571
        %v585 = vmul.f32 %v366, %v571
        %v586 = vmul.f32 %v367, %v571
        %v587 = vmul.f32 %v368, %v571
        %v604 = vrot.slane %v572, 1
        %v605 = vrot.slane %v573, 1
        %v606 = vsel %vm430, %v604, %v605
        %v607 = vrot.slane %v574, 1
        %v608 = vrot.slane %v575, 1
        %v609 = vsel %vm430, %v607, %v608
        %v610 = vrot.slane %v576, 1
        %v611 = vrot.slane %v577, 1
        %v612 = vsel %vm430, %v610, %v611
        %v613 = vrot.slane %v578, 1
        %v614 = vrot.slane %v579, 1
        %v615 = vsel %vm430, %v613, %v614
        %v616 = vrot.slane %v580, 1
        %v617 = vrot.slane %v581, 1
        %v618 = vsel %vm430, %v616, %v617
        %v619 = vrot.slane %v582, 1
        %v620 = vrot.slane %v583, 1
        %v621 = vsel %vm430, %v619, %v620
        %v622 = vrot.slane %v584, 1
        %v623 = vrot.slane %v585, 1
        %v624 = vsel %vm430, %v622, %v623
        %v625 = vrot.slane %v586, 1
        %v626 = vrot.slane %v587, 1
        %v627 = vsel %vm430, %v625, %v626
        %v636 = vadd.f32 %v560, %v606
        %v637 = vadd.f32 %v561, %v609
        %v638 = vadd.f32 %v562, %v612
        %v639 = vadd.f32 %v563, %v615
        %v640 = vadd.f32 %v564, %v618
        %v641 = vadd.f32 %v565, %v621
        %v642 = vadd.f32 %v566, %v624
        %v643 = vadd.f32 %v567, %v627
        %v644 = vlaneseq
        %v645 = vshrl.u32 %v644, 7
        %v646 = vsub.s32 2, %v645
        %v647 = vrot.slane %v372, %v646
        %v648 = vmul.f32 %v353, %v647
        %v649 = vmul.f32 %v354, %v647
        %v650 = vmul.f32 %v355, %v647
        %v651 = vmul.f32 %v356, %v647
        %v652 = vmul.f32 %v357, %v647
        %v653 = vmul.f32 %v358, %v647
        %v654 = vmul.f32 %v359, %v647
        %v655 = vmul.f32 %v360, %v647
        %v656 = vmul.f32 %v361, %v647
        %v657 = vmul.f32 %v362, %v647
        %v658 = vmul.f32 %v363, %v647
        %v659 = vmul.f32 %v364, %v647
        %v660 = vmul.f32 %v365, %v647
        %v661 = vmul.f32 %v366, %v647
        %v662 = vmul.f32 %v367, %v647
        %v663 = vmul.f32 %v368, %v647
        %v680 = vrot.slane %v648, 2
        %v681 = vrot.slane %v649, 2
        %v682 = vsel %vm507, %v680, %v681
        %v683 = vrot.slane %v650, 2
        %v684 = vrot.slane %v651, 2
        %v685 = vsel %vm507, %v683, %v684
        %v686 = vrot.slane %v652, 2
        %v687 = vrot.slane %v653, 2
        %v688 = vsel %vm507, %v686, %v687
        %v689 = vrot.slane %v654, 2
        %v690 = vrot.slane %v655, 2
        %v691 = vsel %vm507, %v689, %v690
        %v692 = vrot.slane %v656, 2
        %v693 = vrot.slane %v657, 2
        %v694 = vsel %vm507, %v692, %v693
        %v695 = vrot.slane %v658, 2
        %v696 = vrot.slane %v659, 2
        %v697 = vsel %vm507, %v695, %v696
        %v698 = vrot.slane %v660, 2
        %v699 = vrot.slane %v661, 2
        %v700 = vsel %vm507, %v698, %v699
        %v701 = vrot.slane %v662, 2
        %v702 = vrot.slane %v663, 2
        %v703 = vsel %vm507, %v701, %v702
        %v712 = vadd.f32 %v636, %v682
        %v713 = vadd.f32 %v637, %v685
        %v714 = vadd.f32 %v638, %v688
        %v715 = vadd.f32 %v639, %v691
        %v716 = vadd.f32 %v640, %v694
        %v717 = vadd.f32 %v641, %v697
        %v718 = vadd.f32 %v642, %v700
        %v719 = vadd.f32 %v643, %v703
        %v720 = vlaneseq
        %v721 = vshrl.u32 %v720, 7
        %v722 = vsub.s32 0, %v721
        %v723 = vrot.slane %v373, %v722
        %v724 = vmul.f32 %v355, %v723
        %v725 = vmul.f32 %v357, %v723
        %v726 = vmul.f32 %v359, %v723
        %v727 = vmul.f32 %v361, %v723
        %v728 = vmul.f32 %v363, %v723
        %v729 = vmul.f32 %v365, %v723
        %v730 = vmul.f32 %v367, %v723
        %v731 = vmul.f32 %v369, %v723
        %v732 = vadd.f32 %v712, %v724
        %v733 = vadd.f32 %v713, %v725
        %v734 = vadd.f32 %v714, %v726
        %v735 = vadd.f32 %v715, %v727
        %v736 = vadd.f32 %v716, %v728
        %v737 = vadd.f32 %v717, %v729
        %v738 = vadd.f32 %v718, %v730
        %v739 = vadd.f32 %v719, %v731
        %v740 = vlaneseq
        %v741 = vshrl.u32 %v740, 7
        %v742 = vsub.s32 1, %v741
        %v743 = vrot.slane %v373, %v742
        %v744 = vmul.f32 %v355, %v743
        %v745 = vmul.f32 %v356, %v743
        %v746 = vmul.f32 %v357, %v743
        %v747 = vmul.f32 %v358, %v743
        %v748 = vmul.f32 %v359, %v743
        %v749 = vmul.f32 %v360, %v743
        %v750 = vmul.f32 %v361, %v743
        %v751 = vmul.f32 %v362, %v743
        %v752 = vmul.f32 %v363, %v743
        %v753 = vmul.f32 %v364, %v743
        %v754 = vmul.f32 %v365, %v743
        %v755 = vmul.f32 %v366, %v743
        %v756 = vmul.f32 %v367, %v743
        %v757 = vmul.f32 %v368, %v743
        %v758 = vmul.f32 %v369, %v743
        %v759 = vmul.f32 %v370, %v743
        %v776 = vrot.slane %v744, 1
        %v777 = vrot.slane %v745, 1
        %v778 = vsel %vm430, %v776, %v777
        %v779 = vrot.slane %v746, 1
        %v780 = vrot.slane %v747, 1
        %v781 = vsel %vm430, %v779, %v780
        %v782 = vrot.slane %v748, 1
        %v783 = vrot.slane %v749, 1
        %v784 = vsel %vm430, %v782, %v783
        %v785 = vrot.slane %v750, 1
        %v786 = vrot.slane %v751, 1
        %v787 = vsel %vm430, %v785, %v786
        %v788 = vrot.slane %v752, 1
        %v789 = vrot.slane %v753, 1
        %v790 = vsel %vm430, %v788, %v789
        %v791 = vrot.slane %v754, 1
        %v792 = vrot.slane %v755, 1
        %v793 = vsel %vm430, %v791, %v792
        %v794 = vrot.slane %v756, 1
        %v795 = vrot.slane %v757, 1
        %v796 = vsel %vm430, %v794, %v795
        %v797 = vrot.slane %v758, 1
        %v798 = vrot.slane %v759, 1
        %v799 = vsel %vm430, %v797, %v798
        %v808 = vadd.f32 %v732, %v778
        %v809 = vadd.f32 %v733, %v781
        %v810 = vadd.f32 %v734, %v784
        %v811 = vadd.f32 %v735, %v787
        %v812 = vadd.f32 %v736, %v790
        %v813 = vadd.f32 %v737, %v793
        %v814 = vadd.f32 %v738, %v796
        %v815 = vadd.f32 %v739, %v799
        %v816 = vlaneseq
        %v817 = vshrl.u32 %v816, 7
        %v818 = vsub.s32 2, %v817
        %v819 = vrot.slane %v373, %v818
        %v820 = vmul.f32 %v355, %v819
        %v821 = vmul.f32 %v356, %v819
        %v822 = vmul.f32 %v357, %v819
        %v823 = vmul.f32 %v358, %v819
        %v824 = vmul.f32 %v359, %v819
        %v825 = vmul.f32 %v360, %v819
        %v826 = vmul.f32 %v361, %v819
        %v827 = vmul.f32 %v362, %v819
        %v828 = vmul.f32 %v363, %v819
        %v829 = vmul.f32 %v364, %v819
        %v830 = vmul.f32 %v365, %v819
        %v831 = vmul.f32 %v366, %v819
        %v832 = vmul.f32 %v367, %v819
        %v833 = vmul.f32 %v368, %v819
        %v834 = vmul.f32 %v369, %v819
        %v835 = vmul.f32 %v370, %v819
        %v852 = vrot.slane %v820, 2
        %v853 = vrot.slane %v821, 2
        %v854 = vsel %vm507, %v852, %v853
        %v855 = vrot.slane %v822, 2
        %v856 = vrot.slane %v823, 2
        %v857 = vsel %vm507, %v855, %v856
        %v858 = vrot.slane %v824, 2
        %v859 = vrot.slane %v825, 2
        %v860 = vsel %vm507, %v858, %v859
        %v861 = vrot.slane %v826, 2
        %v862 = vrot.slane %v827, 2
        %v863 = vsel %vm507, %v861, %v862
        %v864 = vrot.slane %v828, 2
        %v865 = vrot.slane %v829, 2
        %v866 = vsel %vm507, %v864, %v865
        %v867 = vrot.slane %v830, 2
        %v868 = vrot.slane %v831, 2
        %v869 = vsel %vm507, %v867, %v868
        %v870 = vrot.slane %v832, 2
        %v871 = vrot.slane %v833, 2
        %v872 = vsel %vm507, %v870, %v871
        %v873 = vrot.slane %v834, 2
        %v874 = vrot.slane %v835, 2
        %v875 = vsel %vm507, %v873, %v874
        %v884 = vadd.f32 %v808, %v854
        %v885 = vadd.f32 %v809, %v857
        %v886 = vadd.f32 %v810, %v860
        %v887 = vadd.f32 %v811, %v863
        %v888 = vadd.f32 %v812, %v866
        %v889 = vadd.f32 %v813, %v869
        %v890 = vadd.f32 %v814, %v872
        %v891 = vadd.f32 %v815, %v875
        %v892 = vld [vmem:[%s2] sm:$0x1]
        %v894 = vlaneseq
        %v895 = vshrl.u32 %v894, 7
        %v896 = vsub.s32 0, %v895
        %v897 = vrot.slane %v892, %v896
        %v899 = vadd.f32 %v884, %v897
        %v900 = vadd.f32 %v885, %v897
        %v901 = vadd.f32 %v886, %v897
        %v902 = vadd.f32 %v887, %v897
        %v903 = vadd.f32 %v888, %v897
        %v904 = vadd.f32 %v889, %v897
        %v905 = vadd.f32 %v890, %v897
        %v906 = vadd.f32 %v891, %v897
        %v907 = vxor.u32 %v899, 2147483648
        %v908 = vxor.u32 %v900, 2147483648
        %v909 = vxor.u32 %v901, 2147483648
        %v910 = vxor.u32 %v902, 2147483648
        %v911 = vxor.u32 %v903, 2147483648
        %v912 = vxor.u32 %v904, 2147483648
        %v913 = vxor.u32 %v905, 2147483648
        %v914 = vxor.u32 %v906, 2147483648
        %v915 = vmul.f32 %v907, 1.442695
        %v916 = vpow.pop %v915
        %v917 = vmul.f32 %v908, 1.442695
        %v918 = vpow.pop %v917
        %v919 = vmul.f32 %v909, 1.442695
        %v920 = vpow.pop %v919
        %v921 = vmul.f32 %v910, 1.442695
        %v922 = vpow.pop %v921
        %v923 = vmul.f32 %v911, 1.442695
        %v924 = vpow.pop %v923
        %v925 = vmul.f32 %v912, 1.442695
        %v926 = vpow.pop %v925
        %v927 = vmul.f32 %v913, 1.442695
        %v928 = vpow.pop %v927
        %v929 = vmul.f32 %v914, 1.442695
        %v930 = vpow.pop %v929
        %v931 = vadd.f32 %v916, 1.0
        %v932 = vadd.f32 %v918, 1.0
        %v933 = vadd.f32 %v920, 1.0
        %v934 = vadd.f32 %v922, 1.0
        %v935 = vadd.f32 %v924, 1.0
        %v936 = vadd.f32 %v926, 1.0
        %v937 = vadd.f32 %v928, 1.0
        %v938 = vadd.f32 %v930, 1.0
        %v939 = vrcp.pop %v931
        %v940 = vmul.f32 1.0, %v939
        %v941 = vrcp.pop %v932
        %v942 = vmul.f32 1.0, %v941
        %v943 = vrcp.pop %v933
        %v944 = vmul.f32 1.0, %v943
        %v945 = vrcp.pop %v934
        %v946 = vmul.f32 1.0, %v945
        %v947 = vrcp.pop %v935
        %v948 = vmul.f32 1.0, %v947
        %v949 = vrcp.pop %v936
        %v950 = vmul.f32 1.0, %v949
        %v951 = vrcp.pop %v937
        %v952 = vmul.f32 1.0, %v951
        %v953 = vrcp.pop %v938
        %v954 = vmul.f32 1.0, %v953
        %v955 = vmul.f32 %v899, %v940
        %v956 = vmul.f32 %v900, %v942
        %v957 = vmul.f32 %v901, %v944
        %v958 = vmul.f32 %v902, %v946
        %v959 = vmul.f32 %v903, %v948
        %v960 = vmul.f32 %v904, %v950
        %v961 = vmul.f32 %v905, %v952
        %v962 = vmul.f32 %v906, %v954
        %vm963 = vcmask 261120
        %v964 = vsel %vm963, %v955, 0.0
        %v965 = vsel %vm963, %v956, 0.0
        %v966 = vadd.f32 %v964, %v965
        %v967 = vsel %vm963, %v957, 0.0
        %v968 = vadd.f32 %v966, %v967
        %v969 = vsel %vm963, %v958, 0.0
        %v970 = vadd.f32 %v968, %v969
        %v971 = vsel %vm963, %v959, 0.0
        %v972 = vadd.f32 %v970, %v971
        %v973 = vsel %vm963, %v960, 0.0
        %v974 = vadd.f32 %v972, %v973
        %v975 = vsel %vm963, %v961, 0.0
        %v976 = vadd.f32 %v974, %v975
        %v977 = vsel %vm963, %v962, 0.0
        %v978 = vadd.f32 %v976, %v977
        %v979 = vrot.slane %v978, 4
        %v980 = vadd.f32 %v978, %v979
        %v981 = vrot.slane %v980, 2
        %v982 = vadd.f32 %v980, %v981
        %v983 = vrot.slane %v982, 1
        %v984 = vadd.f32 %v982, %v983
        %v985 = vmul.f32 %v984, 0.015625
        %v986 = vld [vmem:[%s3] sm:$0xff]
        %v987 = vmul.f32 %v985, %v986
        %v988 = vsel %vm963, %v987, 0.0
        %989 = vadd.xlane.f32.xlu0 %v988
        %v990 = vpop.xlane.xlu0 %989
        %v991 = vld [vmem:[%s4] sm:$0xff]
        %v992 = vadd.f32 %v990, %v991
        %v993 = vxor.u32 %v992, 2147483648
        %v994 = vmul.f32 %v993, 1.442695
        %v995 = vpow.pop %v994
        %v996 = vadd.f32 %v995, 1.0
        %v997 = vrcp.pop %v996
        %v998 = vmul.f32 1.0, %v997
        %v999 = vmul.f32 %v992, %v998
        %v1000 = vld [vmem:[%s5] sm:$0xff]
        %1002 = vset.pattern.permute.xlu0 0
        %1003 = vperm.xlu0 %1002, %v999
        %v1004 = vpop.permute.xlu0 %1003
        %v1006 = vmul.f32 %v1004, %v1000
        %v1007 = vsel %vm963, %v1006, 0.0
        %v1008 = vrot.slane %v1007, 4
        %v1009 = vadd.f32 %v1007, %v1008
        %v1010 = vrot.slane %v1009, 2
        %v1011 = vadd.f32 %v1009, %v1010
        %v1012 = vrot.slane %v1011, 1
        %v1013 = vadd.f32 %v1011, %v1012
        %v1014 = vld [vmem:[%s6] sm:$0x1]
        %v1015 = vadd.f32 %v1013, %v1014
        %v1016 = vxor.u32 %v1015, 2147483648
        %v1017 = vmul.f32 %v1016, 1.442695
        %v1018 = vpow.pop %v1017
        %v1019 = vadd.f32 %v1018, 1.0
        %v1020 = vrcp.pop %v1019
        %v1021 = vmul.f32 1.0, %v1020
        %v1022 = vlaneseq
        %v1023 = vshrl.u32 %v1022, 7
        %v1024 = vsub.s32 0, %v1023
        %v1025 = vrot.slane %v1021, %v1024
        %v1026 = vmul.f32 %v955, %v1025
        %v1027 = vmul.f32 %v956, %v1025
        %v1028 = vmul.f32 %v957, %v1025
        %v1029 = vmul.f32 %v958, %v1025
        %v1030 = vmul.f32 %v959, %v1025
        %v1031 = vmul.f32 %v960, %v1025
        %v1032 = vmul.f32 %v961, %v1025
        %v1033 = vmul.f32 %v962, %v1025
        %v1034 = vpack.c.bf16 %v1027, %v1026
        %v1035 = vpack.c.bf16 %v1029, %v1028
        %v1036 = vpack.c.bf16 %v1031, %v1030
        %v1037 = vpack.c.bf16 %v1033, %v1032
        %v1038 = vld [vmem:[%s7] sm:$0xf]
        %v1039 = vld [vmem:[%s7 + $0x4] sm:$0xf]
        %v1040 = vld [vmem:[%s7 + $0x8] sm:$0xf]
        %v1041 = vld [vmem:[%s7 + $0xc] sm:$0xf]
        %v1042 = vld [vmem:[%s8] sm:$0x1]
        %v1044 = vlaneseq
        %v1045 = vshrl.u32 %v1044, 7
        %v1046 = vsub.s32 0, %v1045
        %v1047 = vrot.slane %v1042, %v1046
        %v1053 = vunpack.c.l.b16 %v1038
        %v1054 = vunpack.c.l.b16 %v1039
        %v1055 = vunpack.c.l.b16 %v1040
        %v1056 = vunpack.c.l.b16 %v1041
        %v1057 = vpack.c.b16 %v1054, %v1053
        %v1058 = vpack.c.b16 %v1056, %v1055
        %v1062 = vsel %vm963, %v1034, 0
        %v1065 = vsel %vm963, %v1035, 0
        %v1068 = vsel %vm963, %v1036, 0
        %v1071 = vsel %vm963, %v1037, 0
        %1073 = vmatprep.subr.bf16.mxu0 0
        %1074 = vmatpush1.bf16.msra.mxu0 0
        %1075 = vmatprep.subr.bf16.mxu0 0
        %1076 = vmatpush1.bf16.msra.mxu0 0
        %1077 = vmatprep.subr.bf16.mxu0 0
        %1078 = vmatpush1.bf16.msra.mxu0 0
        %1079 = vmatprep.subr.bf16.mxu0 0
        %1080 = vmatpush1.bf16.msra.mxu0 0
        %1081 = vmatprep.subr.bf16.mxu0 0
        %1082 = vmatpush1.bf16.msra.mxu0 0
        %1083 = vmatprep.subr.bf16.mxu0 0
        %1084 = vmatpush1.bf16.msra.mxu0 0
        %1085 = vmatprep.subr.bf16.mxu0 0
        %1086 = vmatpush1.bf16.msra.mxu0 %v1058
        %1087 = vmatprep.subr.bf16.mxu0 0
        %1088 = vmatpush1.bf16.msra.mxu0 %v1057
        %1089 = vmatprep.subr.bf16.mxu0 0
        %1090 = vmatpush2.bf16.msra.mxu0 0
        %1091 = vmatprep.subr.bf16.mxu0 0
        %1092 = vmatpush2.bf16.msra.mxu0 0
        %1093 = vmatprep.subr.bf16.mxu0 0
        %1094 = vmatpush2.bf16.msra.mxu0 0
        %1095 = vmatprep.subr.bf16.mxu0 0
        %1096 = vmatpush2.bf16.msra.mxu0 0
        %1097 = vmatprep.subr.bf16.mxu0 0
        %1098 = vmatpush2.bf16.msra.mxu0 0
        %1099 = vmatprep.subr.bf16.mxu0 0
        %1100 = vmatpush2.bf16.msra.mxu0 0
        %1101 = vmatprep.subr.bf16.mxu0 0
        %1102 = vmatpush2.bf16.msra.mxu0 0
        %1103 = vmatprep.subr.bf16.mxu0 0
        %1104 = vmatpush2.bf16.msra.mxu0 0
        %1105 = vmatprep.mubr.bf16.mxu0 0
        %1106 = vmatmul.mubr.bf16.gmra.mxu0 %v1062
        %v1107 = vpop.f32.mrf.mxu0
        %v1108 = vadd.f32 %v1047, %v1107
        %v1109 = vpop.f32.mrf.mxu0
        %v1110 = vpop.f32.mrf.mxu0
        %v1111 = vadd.f32 %v1047, %v1110
        %v1112 = vpop.f32.mrf.mxu0
        %1113 = vmatprep.mubr.bf16.mxu0 0
        %1114 = vmatmul.mubr.bf16.gmra.mxu0 %v1065
        %v1115 = vpop.f32.mrf.mxu0
        %v1116 = vadd.f32 %v1047, %v1115
        %v1117 = vpop.f32.mrf.mxu0
        %v1118 = vpop.f32.mrf.mxu0
        %v1119 = vadd.f32 %v1047, %v1118
        %v1120 = vpop.f32.mrf.mxu0
        %1121 = vmatprep.mubr.bf16.mxu0 0
        %1122 = vmatmul.mubr.bf16.gmra.mxu0 %v1068
        %v1123 = vpop.f32.mrf.mxu0
        %v1124 = vadd.f32 %v1047, %v1123
        %v1125 = vpop.f32.mrf.mxu0
        %v1126 = vpop.f32.mrf.mxu0
        %v1127 = vadd.f32 %v1047, %v1126
        %v1128 = vpop.f32.mrf.mxu0
        %1129 = vmatprep.mubr.bf16.mxu0 0
        %1130 = vmatmul.mubr.bf16.gmra.mxu0 %v1071
        %v1131 = vpop.f32.mrf.mxu0
        %v1132 = vadd.f32 %v1047, %v1131
        %v1133 = vpop.f32.mrf.mxu0
        %v1134 = vpop.f32.mrf.mxu0
        %v1135 = vadd.f32 %v1047, %v1134
        %v1136 = vpop.f32.mrf.mxu0
        %1137 = vdwg.mxu0
        %v1138 = vxor.u32 %v1108, 2147483648
        %v1139 = vxor.u32 %v1111, 2147483648
        %v1140 = vxor.u32 %v1116, 2147483648
        %v1141 = vxor.u32 %v1119, 2147483648
        %v1142 = vxor.u32 %v1124, 2147483648
        %v1143 = vxor.u32 %v1127, 2147483648
        %v1144 = vxor.u32 %v1132, 2147483648
        %v1145 = vxor.u32 %v1135, 2147483648
        %v1146 = vmul.f32 %v1138, 1.442695
        %v1147 = vpow.pop %v1146
        %v1148 = vmul.f32 %v1139, 1.442695
        %v1149 = vpow.pop %v1148
        %v1150 = vmul.f32 %v1140, 1.442695
        %v1151 = vpow.pop %v1150
        %v1152 = vmul.f32 %v1141, 1.442695
        %v1153 = vpow.pop %v1152
        %v1154 = vmul.f32 %v1142, 1.442695
        %v1155 = vpow.pop %v1154
        %v1156 = vmul.f32 %v1143, 1.442695
        %v1157 = vpow.pop %v1156
        %v1158 = vmul.f32 %v1144, 1.442695
        %v1159 = vpow.pop %v1158
        %v1160 = vmul.f32 %v1145, 1.442695
        %v1161 = vpow.pop %v1160
        %v1162 = vadd.f32 %v1147, 1.0
        %v1163 = vadd.f32 %v1149, 1.0
        %v1164 = vadd.f32 %v1151, 1.0
        %v1165 = vadd.f32 %v1153, 1.0
        %v1166 = vadd.f32 %v1155, 1.0
        %v1167 = vadd.f32 %v1157, 1.0
        %v1168 = vadd.f32 %v1159, 1.0
        %v1169 = vadd.f32 %v1161, 1.0
        %v1170 = vrcp.pop %v1162
        %v1171 = vmul.f32 1.0, %v1170
        %v1172 = vrcp.pop %v1163
        %v1173 = vmul.f32 1.0, %v1172
        %v1174 = vrcp.pop %v1164
        %v1175 = vmul.f32 1.0, %v1174
        %v1176 = vrcp.pop %v1165
        %v1177 = vmul.f32 1.0, %v1176
        %v1178 = vrcp.pop %v1166
        %v1179 = vmul.f32 1.0, %v1178
        %v1180 = vrcp.pop %v1167
        %v1181 = vmul.f32 1.0, %v1180
        %v1182 = vrcp.pop %v1168
        %v1183 = vmul.f32 1.0, %v1182
        %v1184 = vrcp.pop %v1169
        %v1185 = vmul.f32 1.0, %v1184
        %v1186 = vmul.f32 %v1108, %v1171
        %v1187 = vmul.f32 %v1111, %v1173
        %v1188 = vmul.f32 %v1116, %v1175
        %v1189 = vmul.f32 %v1119, %v1177
        %v1190 = vmul.f32 %v1124, %v1179
        %v1191 = vmul.f32 %v1127, %v1181
        %v1192 = vmul.f32 %v1132, %v1183
        %v1193 = vmul.f32 %v1135, %v1185
        %v1194 = vadd.f32 %v1186, %v1187
        %v1195 = vadd.f32 %v1194, %v1188
        %v1196 = vadd.f32 %v1195, %v1189
        %v1197 = vadd.f32 %v1196, %v1190
        %v1198 = vadd.f32 %v1197, %v1191
        %v1199 = vadd.f32 %v1198, %v1192
        %v1200 = vadd.f32 %v1199, %v1193
        %v1201 = vrot.slane %v1200, 4
        %v1202 = vadd.f32 %v1200, %v1201
        %v1203 = vrot.slane %v1202, 2
        %v1204 = vadd.f32 %v1202, %v1203
        %v1205 = vrot.slane %v1204, 1
        %v1206 = vadd.f32 %v1204, %v1205
        %v1207 = vmul.f32 %v1206, 0.015625
        %1208 = vst [vmem:[%s324] sm:$0x1] %v1207
        %s1209 = sand.u32 %s225, 1
        %s1210 = scalar_lea.sflag [#allocation3], %s1209
        %s1211 = sand.u32 %s225, 1
        %s1212 = scalar_lea.vmem [#allocation2], %s1211
        // Predicated region
        $region57: #{effnet_forward.3} parent=55 // pred_check
          %p1213 = pneg %p235
        $region58: #{effnet_forward.3} parent=55 // pred_check_branch
          %1215 = sbr.rel (%p1213) target = $region60
        $region59: #{effnet_forward.3} parent=55 // pred_region
          %s1217 = ssub.s32 16, 16
          %1218 = vsyncadd %s1210, %s1217
          %s1219 = smul.addr %s23, 16
          %s1220 = scalar_lea.hbm %s9, %s1219
          %s1222 = sshll.u32 %s1212, 4
          %s1223 = int_to_ptr.vmem [resolvable:$true] %s1222
          %1225 = dma.vmem_to_hbm [thread:$0]  %s1223, 16, %s1220, %s1210
        $region60: #{effnet_forward.3} parent=55 // pred_fallthru
          _
      $region56: #{effnet_forward.3} parent=5 // pred_fallthru
        _
      %p1226 = scmp.le.s32.totalorder 2, %s18
      // Predicated region
      $region61: #{effnet_forward.3} parent=5 // pred_check
        %p1227 = pneg %p1226
      $region62: #{effnet_forward.3} parent=5 // pred_check_branch
        %1229 = sbr.rel (%p1227) target = $region64
      $region63: #{effnet_forward.3} parent=5 // pred_region
        %s1230 = ssub.s32 %s18, 2
        // Predicated region
        $region65: #{effnet_forward.3} parent=63 // pred_check
          %p1231 = pneg %p241
        $region66: #{effnet_forward.3} parent=63 // pred_check_branch
          %1233 = sbr.rel (%p1231) target = $region68
        $region67: #{effnet_forward.3} parent=63 // pred_region
          %s1234 = sand.u32 %s226, 1
          %s1235 = scalar_lea.sflag [#allocation3], %s1234
          %s1236 = sand.u32 %s226, 1
          %s1237 = scalar_lea.vmem [#allocation2], %s1236
          %1238 = dma.done %s1235, 16
        $region68: #{effnet_forward.3} parent=63 // pred_fallthru
          _
      $region64: #{effnet_forward.3} parent=5 // pred_fallthru
        _
    $region6: #{effnet_forward.3} parent=1 // loop_footer
      %s22 = sadd.s32 1, %s18
    $region7: #{effnet_forward.3} parent=1 // loop_footer_branch
      %17 = sbr.rel target = $region3
    $region8: #{effnet_forward.3} parent=1 // loop_exit
      _
    %1239 = vsyncpa [#allocation3], 1
    %s1240 = scalar_lea.sflag [#allocation3], 1
    %1241 = vsyncpa %s1240, 1

</llo_original>
